<compile_context>
chip_gen: v7x
topology: tpu7x:2x2x1
jax: 0.10.0
libtpu: 0.0.40
codegen_flags: <defaults>
</compile_context>

<pallas_src>
import functools
import math

import jax
import jax.numpy as jnp
from jax.experimental import pallas as pl
from jax.experimental.pallas import tpu as pltpu

EPS = 1e-5    # torch.nn.LayerNorm default eps
LANES = 128   # TPU vreg lane width


def _cdiv(a, b):
    return -(-a // b)


def _round_up(x, m):
    return _cdiv(x, m) * m


def decode_layer_kernel(enc_ref, dec_ref, w_ref, vec_ref, out_ref, *,
                        mxu_dtype, e_valid):
    Bt, S, Ep = dec_ref.shape
    rows = Bt * S
    inv_e = 1.0 / float(e_valid)

    # (B_tile, S, Ep) -> (B_tile*S, Ep): cheap leading-dim merge (E stays on lanes).
    x_dec = dec_ref[...].reshape(rows, Ep)
    dec_f32 = x_dec.astype(jnp.float32)      # residual / LayerNorm path (f32)
    dec_mx = x_dec.astype(mxu_dtype)         # MXU path (no-op when already bf16)
    enc_mx = enc_ref[...].reshape(rows, Ep).astype(mxu_dtype)

    def layer_norm(x, g, b):
        # Single-pass stats (sum, sum of squares).  Padded lanes of x are exactly
        # zero (weights / gamma / beta are zero-padded), so dividing by e_valid
        # gives the statistics over the real embedding lanes only.
        s1 = jnp.sum(x, axis=-1, keepdims=True)
        s2 = jnp.sum(x * x, axis=-1, keepdims=True)
        mu = s1 * inv_e
        var = s2 * inv_e - mu * mu
        return (x - mu) * jax.lax.rsqrt(var + EPS) * g + b

    def softmax_last(x):
        m = jnp.max(x, axis=-1, keepdims=True)
        e = jnp.exp(x - m)
        # EUP approximate reciprocal instead of a VALU divide.
        return e * pl.reciprocal(jnp.sum(e, axis=-1, keepdims=True), approx=True)

    def w_cols(c0, n):
        # Static, lane-aligned slice of the resident weight slab: (Ep, n*Ep).
        return w_ref[:, c0 * Ep:(c0 + n) * Ep]

    def attn(q2d, k2d, v2d, xq_f32, w_fc, g, b):
        q = q2d.reshape(Bt, S, Ep)
        k = k2d.reshape(Bt, S, Ep)
        v = v2d.reshape(Bt, S, Ep)
        # n_heads == 1 -> single head; score scale 1/sqrt(n_heads) = 1 (dropped).
        # TODO(synk): at S=8 these are many tiny MXU ops; if the vex slot ever
        # dominates, switch to a block-diagonal (rows x rows) masked matmul.
        s = jnp.einsum("bqd,bkd->bqk", q, k, preferred_element_type=jnp.float32)
        p = softmax_last(s)
        ctx = jnp.einsum("bqk,bkd->bqd", p.astype(mxu_dtype), v,
                         preferred_element_type=jnp.float32)
        ctx2d = jnp.dot(ctx.reshape(rows, Ep).astype(mxu_dtype), w_fc,
                        preferred_element_type=jnp.float32)
        return layer_norm(ctx2d + xq_f32, g, b)

    # ---- attention1: self-attention; fused q|k|v projection (one MXU launch) ----
    qkv1 = jnp.dot(dec_mx, w_cols(0, 3),
                   preferred_element_type=jnp.float32).astype(mxu_dtype)
    a1 = attn(qkv1[:, 0 * Ep:1 * Ep], qkv1[:, 1 * Ep:2 * Ep], qkv1[:, 2 * Ep:3 * Ep],
              dec_f32, w_cols(3, 1), vec_ref[0:1, :], vec_ref[1:2, :])

    # ---- attention2: cross-attention; q from a1, fused k|v from encoder ----
    q2 = jnp.dot(a1.astype(mxu_dtype), w_cols(4, 1),
                 preferred_element_type=jnp.float32).astype(mxu_dtype)
    kv2 = jnp.dot(enc_mx, w_cols(5, 2),
                  preferred_element_type=jnp.float32).astype(mxu_dtype)
    a2 = attn(q2, kv2[:, 0 * Ep:1 * Ep], kv2[:, 1 * Ep:2 * Ep],
              a1, w_cols(7, 1), vec_ref[2:3, :], vec_ref[3:4, :])

    # ---- feedforward: Linear(E->1, no bias) -> ReLU -> Linear(1->E, no bias) ----
    # feature_dimension == 1 collapses to a lane reduction + outer product.
    w1 = vec_ref[6:7, :]    # (1, Ep)  == W1     (zero-padded)
    w2t = vec_ref[7:8, :]   # (1, Ep)  == W2.T   (zero-padded)
    h = jnp.maximum(jnp.sum(a2 * w1, axis=-1, keepdims=True), 0.0)   # (rows, 1)
    ff = h * w2t                                                      # (rows, Ep)
    out2d = layer_norm(ff + a2, vec_ref[4:5, :], vec_ref[5:6, :])

    out_ref[...] = out2d.reshape(Bt, S, Ep).astype(out_ref.dtype)


def _pick_b_tile(B, S, target_rows=256, min_grid_steps=2):
    """rows = B_tile*S is the M dim of every projection / FFN matmul.  Fill it up
    to ~target_rows (256 fills the v6e/v7x MXU rows without exhausting the 64-vreg
    file), but keep >= min_grid_steps grid steps when B allows so the 'parallel'
    batch axis can shard across v7x's two TensorCores."""
    bt = max(1, min(B, target_rows // max(S, 1)))
    if B >= min_grid_steps and _cdiv(B, bt) < min_grid_steps:
        bt = _cdiv(B, min_grid_steps)
    return bt


def decode_layer(encode_output, decode_inputs, params,
                 dec_mask=None, dec_enc_mask=None, *,
                 use_bf16_matmul=True, target_rows=256):
    """encode_output, decode_inputs: (B, S, E) float32.  Masks ignored (see note)."""
    del dec_mask, dec_enc_mask  # unused by the reference module's math
    B, S, E = decode_inputs.shape

    mxu_dtype = jnp.bfloat16 if use_bf16_matmul else jnp.float32
    act_dtype = mxu_dtype  # bf16 activations halve HBM->VMEM activation traffic

    # Lane-dense layout: zero-pad E up to the 128-lane width.  Same vreg count,
    # full lane/MXU fill, unmasked vst on the output.
    E_pad = _round_up(E, LANES)

    B_tile = _pick_b_tile(B, S, target_rows)
    grid_b = _cdiv(B, B_tile)
    B_pad = grid_b * B_tile

    def prep_act(x):
        x = jnp.pad(x, ((0, B_pad - B), (0, 0), (0, E_pad - E)))
        return x.astype(act_dtype)

    enc_p = prep_act(encode_output)
    dec_p = prep_act(decode_inputs)

    def wpad(w):
        # torch Linear weight (out, in) -> (in, out), zero-padded to (E_pad, E_pad);
        # no transposes inside the kernel.
        wt = jnp.asarray(w).T
        return jnp.pad(wt, ((0, E_pad - wt.shape[0]), (0, E_pad - wt.shape[1])))

    # One resident weight slab: [q1|k1|v1 | fc1 | q2 | k2|v2 | fc2] along columns.
    w_slab = jnp.concatenate([
        wpad(params["wq1"]), wpad(params["wk1"]), wpad(params["wv1"]),
        wpad(params["wfc1"]),
        wpad(params["wq2"]),
        wpad(params["wk2"]), wpad(params["wv2"]),
        wpad(params["wfc2"]),
    ], axis=1).astype(mxu_dtype)                       # (E_pad, 8*E_pad)

    def vpad(v):
        v = jnp.asarray(v).reshape(-1)
        return jnp.pad(v, (0, E_pad - v.shape[0]))

    vec_stack = jnp.stack([
        vpad(params["g1"]), vpad(params["b1"]),
        vpad(params["g2"]), vpad(params["b2"]),
        vpad(params["gf"]), vpad(params["bf"]),
        vpad(params["w1"]), vpad(params["w2"]),
    ]).astype(jnp.float32)                             # (8, E_pad)

    act_spec = pl.BlockSpec((B_tile, S, E_pad), lambda b: (b, 0, 0))
    out_spec = pl.BlockSpec((B_tile, S, E_pad), lambda b: (b, 0, 0))
    # Constant index maps -> weight / vector slabs are fetched once and stay
    # resident in VMEM across the whole grid (no per-step refetch).
    w_spec = pl.BlockSpec((E_pad, 8 * E_pad), lambda b: (0, 0))
    vec_spec = pl.BlockSpec((8, E_pad), lambda b: (0, 0))

    # Right-size the VMEM request (v7x only has 64 MiB per TensorCore).
    blk = B_tile * S * E_pad
    footprint = (2 * 2 * blk * jnp.dtype(act_dtype).itemsize    # 2 inputs, double-buffered
                 + 2 * blk * 4                                   # f32 output, double-buffered
                 + 2 * E_pad * 8 * E_pad * jnp.dtype(mxu_dtype).itemsize
                 + 2 * 8 * E_pad * 4)
    vmem_limit = int(min(32 * 2**20, max(4 * 2**20, 2 * footprint)))

    kernel = functools.partial(decode_layer_kernel, mxu_dtype=mxu_dtype, e_valid=E)

    out = pl.pallas_call(
        kernel,
        out_shape=jax.ShapeDtypeStruct((B_pad, S, E_pad), jnp.float32),
        grid=(grid_b,),
        in_specs=[act_spec, act_spec, w_spec, vec_spec],
        out_specs=out_spec,
        compiler_params=pltpu.CompilerParams(
            dimension_semantics=("parallel",),
            vmem_limit_bytes=vmem_limit,
        ),
    )(enc_p, dec_p, w_slab, vec_stack)

    return out[:B, :, :E]


# ---------------------------------------------------------------------------
# Pure-JAX reference (mirrors the PyTorch math) for the correctness check.
# ---------------------------------------------------------------------------
def decode_layer_ref(enc, dec, p):
    def ln(x, g, b):
        mu = x.mean(-1, keepdims=True)
        var = ((x - mu) ** 2).mean(-1, keepdims=True)
        return (x - mu) / jnp.sqrt(var + EPS) * g + b

    def mha(xq, xkv, wq, wk, wv, wfc, g, b):
        q = xq @ wq.T
        k = xkv @ wk.T
        v = xkv @ wv.T
        score = jax.nn.softmax(q @ jnp.swapaxes(k, -1, -2) / math.sqrt(1.0), axis=-1)
        ctx = score @ v
        return ln(ctx @ wfc.T + xq, g, b)

    a1 = mha(dec, dec, p["wq1"], p["wk1"], p["wv1"], p["wfc1"], p["g1"], p["b1"])
    a2 = mha(a1, enc, p["wq2"], p["wk2"], p["wv2"], p["wfc2"], p["g2"], p["b2"])
    h = jnp.maximum(a2 @ p["w1"].T, 0.0)        # (B, S, 1)
    ff = h @ p["w2"].T                           # (B, S, E)
    return ln(ff + a2, p["gf"], p["bf"])


def make_params(key, E):
    ks = jax.random.split(key, 16)
    s = 1.0 / math.sqrt(E)
    u = lambda k, shp: jax.random.uniform(k, shp, jnp.float32, -s, s)
    gm = lambda k: 1.0 + 0.1 * jax.random.normal(k, (1, E), jnp.float32)
    bt = lambda k: 0.1 * jax.random.normal(k, (1, E), jnp.float32)
    return {
        # attention1 (n_heads = 1 -> all weights are (E, E))
        "wq1": u(ks[0], (E, E)), "wk1": u(ks[1], (E, E)),
        "wv1": u(ks[2], (E, E)), "wfc1": u(ks[3], (E, E)),
        "g1": gm(ks[10]), "b1": bt(ks[11]),
        # attention2
        "wq2": u(ks[4], (E, E)), "wk2": u(ks[5], (E, E)),
        "wv2": u(ks[6], (E, E)), "wfc2": u(ks[7], (E, E)),
        "g2": gm(ks[12]), "b2": bt(ks[13]),
        # feedforward: Linear(E, 1) weight is (1, E); Linear(1, E) weight is (E, 1)
        "w1": u(ks[8], (1, E)),
        "w2": jax.random.uniform(ks[9], (E, 1), jnp.float32, -1.0, 1.0),
        "gf": gm(ks[14]), "bf": bt(ks[15]),
    }


if __name__ == "__main__":
    B, S, E = 2, 8, 32
    key = jax.random.PRNGKey(0)
    k_enc, k_dec, k_par = jax.random.split(key, 3)

    encode_output = jax.random.normal(k_enc, (B, S, E), jnp.float32)
    decode_inputs = jax.random.normal(k_dec, (B, S, E), jnp.float32)
    params = make_params(k_par, E)

    # masks exist in the PyTorch signature but are unused by the module's math
    dec_mask = jnp.zeros((B, S, S), jnp.float32)
    dec_enc_mask = jnp.zeros((B, S, S), jnp.float32)

    ref = decode_layer_ref(encode_output, decode_inputs, params)

    # f32 MXU path: only deviations from the reference are the EUP approximate
    # reciprocal in softmax and the single-pass LayerNorm statistics.
    out_f32 = decode_layer(encode_output, decode_inputs, params,
                           dec_mask, dec_enc_mask, use_bf16_matmul=False)
    out_f32 = jax.block_until_ready(out_f32)
    assert out_f32.shape == (B, S, E)
    assert jnp.allclose(out_f32, ref, atol=3e-3, rtol=3e-3), (
        f"f32 path: max abs diff = {jnp.max(jnp.abs(out_f32 - ref))}"
    )

    # Default path: bf16 MXU operands / f32 accumulation, bf16-shipped activations.
    # Looser tolerance for bf16 rounding of inputs and matmul operands.
    out_bf16 = decode_layer(encode_output, decode_inputs, params,
                            dec_mask, dec_enc_mask)
    out_bf16 = jax.block_until_ready(out_bf16)
    assert out_bf16.shape == (B, S, E)
    assert jnp.allclose(out_bf16, ref, atol=1e-1, rtol=1e-1), (
        f"bf16 path: max abs diff = {jnp.max(jnp.abs(out_bf16 - ref))}"
    )

    print("KERNEL_OK")
</pallas_src>

<mosaic_0001>
module attributes {stable_mosaic.version = 11 : i64} {
  func.func @decode_layer_kernel(%arg0: i32, %arg1: memref<1x8x128xf32, #tpu.memory_space<vmem>>, %arg2: memref<1x8x128xf32, #tpu.memory_space<vmem>>, %arg3: memref<128x1024xf32, #tpu.memory_space<vmem>>, %arg4: memref<8x128xf32, #tpu.memory_space<vmem>>, %arg5: memref<1x8x128xf32, #tpu.memory_space<vmem>>) attributes {dimension_semantics = [#tpu.dimension_semantics<parallel>], iteration_bounds = array<i64: 2>, scalar_prefetch = 0 : i64, scratch_operands = 0 : i64, tpu.core_type = #tpu.core_type<tc>, window_params = [{transform_indices = @transform_0, window_bounds = array<i64: 1, 8, 128>}, {transform_indices = @transform_1, window_bounds = array<i64: 1, 8, 128>}, {pipeline_mode = #tpu.pipeline_mode<synchronous>, transform_indices = @transform_2, window_bounds = array<i64: 128, 1024>}, {pipeline_mode = #tpu.pipeline_mode<synchronous>, transform_indices = @transform_3, window_bounds = array<i64: 8, 128>}, {transform_indices = @transform_4, window_bounds = array<i64: 1, 8, 128>}]} {
    %c0 = arith.constant 0 : index
    %c0_0 = arith.constant 0 : index
    %c0_1 = arith.constant 0 : index
    %0 = vector.load %arg2[%c0, %c0_0, %c0_1] : memref<1x8x128xf32, #tpu.memory_space<vmem>>, vector<1x8x128xf32>
    %1 = vector.shape_cast %0 : vector<1x8x128xf32> to vector<8x128xf32>
    %c0_2 = arith.constant 0 : index
    %c0_3 = arith.constant 0 : index
    %c0_4 = arith.constant 0 : index
    %2 = vector.load %arg1[%c0_2, %c0_3, %c0_4] : memref<1x8x128xf32, #tpu.memory_space<vmem>>, vector<1x8x128xf32>
    %3 = vector.shape_cast %2 : vector<1x8x128xf32> to vector<8x128xf32>
    %c0_5 = arith.constant 0 : index
    %c0_6 = arith.constant 0 : index
    %4 = vector.load %arg3[%c0_5, %c0_6] : memref<128x1024xf32, #tpu.memory_space<vmem>>, vector<128x384xf32>
    %cst = arith.constant dense<0.000000e+00> : vector<8x384xf32>
    %5 = tpu.matmul %1, %4, %cst {dimension_numbers = #tpu.dot_dimension_numbers<[1], [0], [0], [1], [0, 0, 1, 1], [], []>} : vector<8x128xf32>, vector<128x384xf32>, vector<8x384xf32> -> vector<8x384xf32>
    %6 = vector.extract_strided_slice %5 {offsets = [0, 0], sizes = [8, 128], strides = [1, 1]} : vector<8x384xf32> to vector<8x128xf32>
    %7 = vector.extract_strided_slice %5 {offsets = [0, 128], sizes = [8, 128], strides = [1, 1]} : vector<8x384xf32> to vector<8x128xf32>
    %8 = vector.extract_strided_slice %5 {offsets = [0, 256], sizes = [8, 128], strides = [1, 1]} : vector<8x384xf32> to vector<8x128xf32>
    %c0_7 = arith.constant 0 : index
    %c384 = arith.constant 384 : index
    %9 = vector.load %arg3[%c0_7, %c384] : memref<128x1024xf32, #tpu.memory_space<vmem>>, vector<128x128xf32>
    %c0_8 = arith.constant 0 : index
    %c0_9 = arith.constant 0 : index
    %10 = vector.load %arg4[%c0_8, %c0_9] : memref<8x128xf32, #tpu.memory_space<vmem>>, vector<1x128xf32>
    %c1 = arith.constant 1 : index
    %c0_10 = arith.constant 0 : index
    %11 = vector.load %arg4[%c1, %c0_10] : memref<8x128xf32, #tpu.memory_space<vmem>>, vector<1x128xf32>
    %12 = vector.shape_cast %6 : vector<8x128xf32> to vector<1x8x128xf32>
    %13 = vector.shape_cast %7 : vector<8x128xf32> to vector<1x8x128xf32>
    %14 = vector.shape_cast %8 : vector<8x128xf32> to vector<1x8x128xf32>
    "tpu.trace_start"() <{level = 10 : i32, message = "bqd,bkd->bqk"}> : () -> ()
    %cst_11 = arith.constant dense<0.000000e+00> : vector<1x8x8xf32>
    %15 = tpu.matmul %12, %13, %cst_11 {dimension_numbers = #tpu.dot_dimension_numbers<[2], [2], [1], [1], [0, 0, 0, 1, 1, 1], [0], [0]>} : vector<1x8x128xf32>, vector<1x8x128xf32>, vector<1x8x8xf32> -> vector<1x8x8xf32>
    "tpu.trace_stop"() : () -> ()
    %cst_12 = arith.constant dense<0xFF800000> : vector<1x8xf32>
    %16 = vector.multi_reduction <maximumf>, %15, %cst_12 [2] : vector<1x8x8xf32> to vector<1x8xf32>
    %17 = vector.shape_cast %16 : vector<1x8xf32> to vector<1x8x1xf32>
    %18 = vector.broadcast %17 : vector<1x8x1xf32> to vector<1x8x8xf32>
    %19 = arith.subf %15, %18 : vector<1x8x8xf32>
    %20 = math.exp %19 : vector<1x8x8xf32>
    %cst_13 = arith.constant dense<0.000000e+00> : vector<1x8xf32>
    %21 = vector.multi_reduction <add>, %20, %cst_13 [2] : vector<1x8x8xf32> to vector<1x8xf32>
    %22 = vector.shape_cast %21 : vector<1x8xf32> to vector<1x8x1xf32>
    %23 = tpu.reciprocal %22 {approx = true} : vector<1x8x1xf32> -> vector<1x8x1xf32>
    %24 = vector.broadcast %23 : vector<1x8x1xf32> to vector<1x8x8xf32>
    %25 = arith.mulf %20, %24 : vector<1x8x8xf32>
    "tpu.trace_start"() <{level = 10 : i32, message = "bqk,bkd->bqd"}> : () -> ()
    %cst_14 = arith.constant dense<0.000000e+00> : vector<1x8x128xf32>
    %26 = tpu.matmul %25, %14, %cst_14 {dimension_numbers = #tpu.dot_dimension_numbers<[2], [1], [1], [2], [0, 0, 0, 1, 1, 2], [0], [0]>} : vector<1x8x8xf32>, vector<1x8x128xf32>, vector<1x8x128xf32> -> vector<1x8x128xf32>
    "tpu.trace_stop"() : () -> ()
    %27 = vector.shape_cast %26 : vector<1x8x128xf32> to vector<8x128xf32>
    %cst_15 = arith.constant dense<0.000000e+00> : vector<8x128xf32>
    %28 = tpu.matmul %27, %9, %cst_15 {dimension_numbers = #tpu.dot_dimension_numbers<[1], [0], [0], [1], [0, 0, 1, 1], [], []>} : vector<8x128xf32>, vector<128x128xf32>, vector<8x128xf32> -> vector<8x128xf32>
    %29 = arith.addf %28, %1 : vector<8x128xf32>
    %cst_16 = arith.constant dense<0.000000e+00> : vector<8xf32>
    %30 = vector.multi_reduction <add>, %29, %cst_16 [1] : vector<8x128xf32> to vector<8xf32>
    %31 = vector.shape_cast %30 : vector<8xf32> to vector<8x1xf32>
    %32 = arith.mulf %29, %29 : vector<8x128xf32>
    %cst_17 = arith.constant dense<0.000000e+00> : vector<8xf32>
    %33 = vector.multi_reduction <add>, %32, %cst_17 [1] : vector<8x128xf32> to vector<8xf32>
    %34 = vector.shape_cast %33 : vector<8xf32> to vector<8x1xf32>
    %cst_18 = arith.constant 3.125000e-02 : f32
    %35 = vector.broadcast %cst_18 : f32 to vector<8x1xf32>
    %36 = arith.mulf %31, %35 : vector<8x1xf32>
    %cst_19 = arith.constant 3.125000e-02 : f32
    %37 = vector.broadcast %cst_19 : f32 to vector<8x1xf32>
    %38 = arith.mulf %34, %37 : vector<8x1xf32>
    %39 = arith.mulf %36, %36 : vector<8x1xf32>
    %40 = arith.subf %38, %39 : vector<8x1xf32>
    %41 = vector.broadcast %36 : vector<8x1xf32> to vector<8x128xf32>
    %42 = arith.subf %29, %41 : vector<8x128xf32>
    %cst_20 = arith.constant 9.99999974E-6 : f32
    %43 = vector.broadcast %cst_20 : f32 to vector<8x1xf32>
    %44 = arith.addf %40, %43 : vector<8x1xf32>
    %45 = math.rsqrt %44 : vector<8x1xf32>
    %46 = vector.broadcast %45 : vector<8x1xf32> to vector<8x128xf32>
    %47 = arith.mulf %42, %46 : vector<8x128xf32>
    %48 = vector.broadcast %10 : vector<1x128xf32> to vector<8x128xf32>
    %49 = arith.mulf %47, %48 : vector<8x128xf32>
    %50 = vector.broadcast %11 : vector<1x128xf32> to vector<8x128xf32>
    %51 = arith.addf %49, %50 : vector<8x128xf32>
    %c0_21 = arith.constant 0 : index
    %c512 = arith.constant 512 : index
    %52 = vector.load %arg3[%c0_21, %c512] : memref<128x1024xf32, #tpu.memory_space<vmem>>, vector<128x128xf32>
    %cst_22 = arith.constant dense<0.000000e+00> : vector<8x128xf32>
    %53 = tpu.matmul %51, %52, %cst_22 {dimension_numbers = #tpu.dot_dimension_numbers<[1], [0], [0], [1], [0, 0, 1, 1], [], []>} : vector<8x128xf32>, vector<128x128xf32>, vector<8x128xf32> -> vector<8x128xf32>
    %c0_23 = arith.constant 0 : index
    %c640 = arith.constant 640 : index
    %54 = vector.load %arg3[%c0_23, %c640] : memref<128x1024xf32, #tpu.memory_space<vmem>>, vector<128x256xf32>
    %cst_24 = arith.constant dense<0.000000e+00> : vector<8x256xf32>
    %55 = tpu.matmul %3, %54, %cst_24 {dimension_numbers = #tpu.dot_dimension_numbers<[1], [0], [0], [1], [0, 0, 1, 1], [], []>} : vector<8x128xf32>, vector<128x256xf32>, vector<8x256xf32> -> vector<8x256xf32>
    %56 = vector.extract_strided_slice %55 {offsets = [0, 0], sizes = [8, 128], strides = [1, 1]} : vector<8x256xf32> to vector<8x128xf32>
    %57 = vector.extract_strided_slice %55 {offsets = [0, 128], sizes = [8, 128], strides = [1, 1]} : vector<8x256xf32> to vector<8x128xf32>
    %c0_25 = arith.constant 0 : index
    %c896 = arith.constant 896 : index
    %58 = vector.load %arg3[%c0_25, %c896] : memref<128x1024xf32, #tpu.memory_space<vmem>>, vector<128x128xf32>
    %c2 = arith.constant 2 : index
    %c0_26 = arith.constant 0 : index
    %59 = vector.load %arg4[%c2, %c0_26] : memref<8x128xf32, #tpu.memory_space<vmem>>, vector<1x128xf32>
    %c3 = arith.constant 3 : index
    %c0_27 = arith.constant 0 : index
    %60 = vector.load %arg4[%c3, %c0_27] : memref<8x128xf32, #tpu.memory_space<vmem>>, vector<1x128xf32>
    %61 = vector.shape_cast %53 : vector<8x128xf32> to vector<1x8x128xf32>
    %62 = vector.shape_cast %56 : vector<8x128xf32> to vector<1x8x128xf32>
    %63 = vector.shape_cast %57 : vector<8x128xf32> to vector<1x8x128xf32>
    "tpu.trace_start"() <{level = 10 : i32, message = "bqd,bkd->bqk"}> : () -> ()
    %cst_28 = arith.constant dense<0.000000e+00> : vector<1x8x8xf32>
    %64 = tpu.matmul %61, %62, %cst_28 {dimension_numbers = #tpu.dot_dimension_numbers<[2], [2], [1], [1], [0, 0, 0, 1, 1, 1], [0], [0]>} : vector<1x8x128xf32>, vector<1x8x128xf32>, vector<1x8x8xf32> -> vector<1x8x8xf32>
    "tpu.trace_stop"() : () -> ()
    %cst_29 = arith.constant dense<0xFF800000> : vector<1x8xf32>
    %65 = vector.multi_reduction <maximumf>, %64, %cst_29 [2] : vector<1x8x8xf32> to vector<1x8xf32>
    %66 = vector.shape_cast %65 : vector<1x8xf32> to vector<1x8x1xf32>
    %67 = vector.broadcast %66 : vector<1x8x1xf32> to vector<1x8x8xf32>
    %68 = arith.subf %64, %67 : vector<1x8x8xf32>
    %69 = math.exp %68 : vector<1x8x8xf32>
    %cst_30 = arith.constant dense<0.000000e+00> : vector<1x8xf32>
    %70 = vector.multi_reduction <add>, %69, %cst_30 [2] : vector<1x8x8xf32> to vector<1x8xf32>
    %71 = vector.shape_cast %70 : vector<1x8xf32> to vector<1x8x1xf32>
    %72 = tpu.reciprocal %71 {approx = true} : vector<1x8x1xf32> -> vector<1x8x1xf32>
    %73 = vector.broadcast %72 : vector<1x8x1xf32> to vector<1x8x8xf32>
    %74 = arith.mulf %69, %73 : vector<1x8x8xf32>
    "tpu.trace_start"() <{level = 10 : i32, message = "bqk,bkd->bqd"}> : () -> ()
    %cst_31 = arith.constant dense<0.000000e+00> : vector<1x8x128xf32>
    %75 = tpu.matmul %74, %63, %cst_31 {dimension_numbers = #tpu.dot_dimension_numbers<[2], [1], [1], [2], [0, 0, 0, 1, 1, 2], [0], [0]>} : vector<1x8x8xf32>, vector<1x8x128xf32>, vector<1x8x128xf32> -> vector<1x8x128xf32>
    "tpu.trace_stop"() : () -> ()
    %76 = vector.shape_cast %75 : vector<1x8x128xf32> to vector<8x128xf32>
    %cst_32 = arith.constant dense<0.000000e+00> : vector<8x128xf32>
    %77 = tpu.matmul %76, %58, %cst_32 {dimension_numbers = #tpu.dot_dimension_numbers<[1], [0], [0], [1], [0, 0, 1, 1], [], []>} : vector<8x128xf32>, vector<128x128xf32>, vector<8x128xf32> -> vector<8x128xf32>
    %78 = arith.addf %77, %51 : vector<8x128xf32>
    %cst_33 = arith.constant dense<0.000000e+00> : vector<8xf32>
    %79 = vector.multi_reduction <add>, %78, %cst_33 [1] : vector<8x128xf32> to vector<8xf32>
    %80 = vector.shape_cast %79 : vector<8xf32> to vector<8x1xf32>
    %81 = arith.mulf %78, %78 : vector<8x128xf32>
    %cst_34 = arith.constant dense<0.000000e+00> : vector<8xf32>
    %82 = vector.multi_reduction <add>, %81, %cst_34 [1] : vector<8x128xf32> to vector<8xf32>
    %83 = vector.shape_cast %82 : vector<8xf32> to vector<8x1xf32>
    %cst_35 = arith.constant 3.125000e-02 : f32
    %84 = vector.broadcast %cst_35 : f32 to vector<8x1xf32>
    %85 = arith.mulf %80, %84 : vector<8x1xf32>
    %cst_36 = arith.constant 3.125000e-02 : f32
    %86 = vector.broadcast %cst_36 : f32 to vector<8x1xf32>
    %87 = arith.mulf %83, %86 : vector<8x1xf32>
    %88 = arith.mulf %85, %85 : vector<8x1xf32>
    %89 = arith.subf %87, %88 : vector<8x1xf32>
    %90 = vector.broadcast %85 : vector<8x1xf32> to vector<8x128xf32>
    %91 = arith.subf %78, %90 : vector<8x128xf32>
    %cst_37 = arith.constant 9.99999974E-6 : f32
    %92 = vector.broadcast %cst_37 : f32 to vector<8x1xf32>
    %93 = arith.addf %89, %92 : vector<8x1xf32>
    %94 = math.rsqrt %93 : vector<8x1xf32>
    %95 = vector.broadcast %94 : vector<8x1xf32> to vector<8x128xf32>
    %96 = arith.mulf %91, %95 : vector<8x128xf32>
    %97 = vector.broadcast %59 : vector<1x128xf32> to vector<8x128xf32>
    %98 = arith.mulf %96, %97 : vector<8x128xf32>
    %99 = vector.broadcast %60 : vector<1x128xf32> to vector<8x128xf32>
    %100 = arith.addf %98, %99 : vector<8x128xf32>
    %c6 = arith.constant 6 : index
    %c0_38 = arith.constant 0 : index
    %101 = vector.load %arg4[%c6, %c0_38] : memref<8x128xf32, #tpu.memory_space<vmem>>, vector<1x128xf32>
    %c7 = arith.constant 7 : index
    %c0_39 = arith.constant 0 : index
    %102 = vector.load %arg4[%c7, %c0_39] : memref<8x128xf32, #tpu.memory_space<vmem>>, vector<1x128xf32>
    %103 = vector.broadcast %101 : vector<1x128xf32> to vector<8x128xf32>
    %104 = arith.mulf %100, %103 : vector<8x128xf32>
    %cst_40 = arith.constant dense<0.000000e+00> : vector<8xf32>
    %105 = vector.multi_reduction <add>, %104, %cst_40 [1] : vector<8x128xf32> to vector<8xf32>
    %106 = vector.shape_cast %105 : vector<8xf32> to vector<8x1xf32>
    %cst_41 = arith.constant 0.000000e+00 : f32
    %107 = vector.broadcast %cst_41 : f32 to vector<8x1xf32>
    %108 = arith.maximumf %106, %107 : vector<8x1xf32>
    %109 = vector.broadcast %108 : vector<8x1xf32> to vector<8x128xf32>
    %110 = vector.broadcast %102 : vector<1x128xf32> to vector<8x128xf32>
    %111 = arith.mulf %109, %110 : vector<8x128xf32>
    %112 = arith.addf %111, %100 : vector<8x128xf32>
    %c4 = arith.constant 4 : index
    %c0_42 = arith.constant 0 : index
    %113 = vector.load %arg4[%c4, %c0_42] : memref<8x128xf32, #tpu.memory_space<vmem>>, vector<1x128xf32>
    %c5 = arith.constant 5 : index
    %c0_43 = arith.constant 0 : index
    %114 = vector.load %arg4[%c5, %c0_43] : memref<8x128xf32, #tpu.memory_space<vmem>>, vector<1x128xf32>
    %cst_44 = arith.constant dense<0.000000e+00> : vector<8xf32>
    %115 = vector.multi_reduction <add>, %112, %cst_44 [1] : vector<8x128xf32> to vector<8xf32>
    %116 = vector.shape_cast %115 : vector<8xf32> to vector<8x1xf32>
    %117 = arith.mulf %112, %112 : vector<8x128xf32>
    %cst_45 = arith.constant dense<0.000000e+00> : vector<8xf32>
    %118 = vector.multi_reduction <add>, %117, %cst_45 [1] : vector<8x128xf32> to vector<8xf32>
    %119 = vector.shape_cast %118 : vector<8xf32> to vector<8x1xf32>
    %cst_46 = arith.constant 3.125000e-02 : f32
    %120 = vector.broadcast %cst_46 : f32 to vector<8x1xf32>
    %121 = arith.mulf %116, %120 : vector<8x1xf32>
    %cst_47 = arith.constant 3.125000e-02 : f32
    %122 = vector.broadcast %cst_47 : f32 to vector<8x1xf32>
    %123 = arith.mulf %119, %122 : vector<8x1xf32>
    %124 = arith.mulf %121, %121 : vector<8x1xf32>
    %125 = arith.subf %123, %124 : vector<8x1xf32>
    %126 = vector.broadcast %121 : vector<8x1xf32> to vector<8x128xf32>
    %127 = arith.subf %112, %126 : vector<8x128xf32>
    %cst_48 = arith.constant 9.99999974E-6 : f32
    %128 = vector.broadcast %cst_48 : f32 to vector<8x1xf32>
    %129 = arith.addf %125, %128 : vector<8x1xf32>
    %130 = math.rsqrt %129 : vector<8x1xf32>
    %131 = vector.broadcast %130 : vector<8x1xf32> to vector<8x128xf32>
    %132 = arith.mulf %127, %131 : vector<8x128xf32>
    %133 = vector.broadcast %113 : vector<1x128xf32> to vector<8x128xf32>
    %134 = arith.mulf %132, %133 : vector<8x128xf32>
    %135 = vector.broadcast %114 : vector<1x128xf32> to vector<8x128xf32>
    %136 = arith.addf %134, %135 : vector<8x128xf32>
    %137 = vector.shape_cast %136 : vector<8x128xf32> to vector<1x8x128xf32>
    %c0_49 = arith.constant 0 : index
    %c0_50 = arith.constant 0 : index
    %c0_51 = arith.constant 0 : index
    %138 = vector.load %arg5[%c0_49, %c0_50, %c0_51] : memref<1x8x128xf32, #tpu.memory_space<vmem>>, vector<1x8x128xf32>
    tpu.vector_store %arg5[%c0_49, %c0_50, %c0_51], %137 {strides = array<i32>} : memref<1x8x128xf32, #tpu.memory_space<vmem>>, vector<1x8x128xf32>,
    return
  }
  func.func @transform_0(%arg0: i32) -> (i32, i32, i32) {
    %c0_i32 = arith.constant 0 : i32
    %c0_i32_0 = arith.constant 0 : i32
    %c0_i32_1 = arith.constant 0 : i32
    return %arg0, %c0_i32, %c0_i32_0 : i32, i32, i32
  }
  func.func @transform_1(%arg0: i32) -> (i32, i32, i32) {
    %c0_i32 = arith.constant 0 : i32
    %c0_i32_0 = arith.constant 0 : i32
    %c0_i32_1 = arith.constant 0 : i32
    return %arg0, %c0_i32, %c0_i32_0 : i32, i32, i32
  }
  func.func @transform_2(%arg0: i32) -> (i32, i32) {
    %c0_i32 = arith.constant 0 : i32
    %c0_i32_0 = arith.constant 0 : i32
    %c0_i32_1 = arith.constant 0 : i32
    return %c0_i32, %c0_i32_0 : i32, i32
  }
  func.func @transform_3(%arg0: i32) -> (i32, i32) {
    %c0_i32 = arith.constant 0 : i32
    %c0_i32_0 = arith.constant 0 : i32
    %c0_i32_1 = arith.constant 0 : i32
    return %c0_i32, %c0_i32_0 : i32, i32
  }
  func.func @transform_4(%arg0: i32) -> (i32, i32, i32) {
    %c0_i32 = arith.constant 0 : i32
    %c0_i32_0 = arith.constant 0 : i32
    %c0_i32_1 = arith.constant 0 : i32
    return %arg0, %c0_i32, %c0_i32_0 : i32, i32, i32
  }
}

</mosaic_0001>

<llo_original>
// kernel: tpu_custom_call.1
$region0: #{tpu_custom_call.1}
  #allocation0 [shape = 'u32[]', space=smem, size = 0x4, offset = 0x4, fixed_abs, tag = 'smem constant byte address 0x4 - core index']
  #allocation1 [shape = 'u32[144,128]{1,0:T(1,128)}', space=vmem, size = 0x12000, scoped, tag = 'internal scratch']
  %s0 = inlined_call_operand.hbm [shape: f32[2,8,128], index: 0, kind: input, shape index: {}]
  %s1 = inlined_call_operand.hbm [shape: f32[2,8,128], index: 1, kind: input, shape index: {}]
  %s2 = inlined_call_operand.hbm [shape: f32[128,1024], index: 2, kind: input, shape index: {}]
  %s3 = inlined_call_operand.vmem [shape: f32[8,128], index: 3, kind: input, shape index: {}]
  %s4 = inlined_call_operand.hbm [shape: f32[2,8,128], index: 4, kind: output, shape index: {}]
  %s5 = sld [smem:[#allocation0]]
  $region61: #{tpu_custom_call.1} parent=0
    _
  %s7 = ssub.s32 1, %s5
  %s8 = scalar_select 0, %s7, %s5
  $region1: #{tpu_custom_call.1} parent=0
    #allocation2 [shape = 'u8[8192]{0}', space=vmem, size = 0x2000, scoped, tag = 'input window, operand 0']
    #allocation3 [shape = 's32[2]{0}', space=sflag, size = 0x8, scoped, tag = 'scoped memory for tpu_custom_call.1']
    #allocation4 [shape = 's32[2]{0}', space=sflag, size = 0x8, scoped, tag = 'scoped memory for tpu_custom_call.1']
    #allocation5 [shape = 'u8[8192]{0}', space=vmem, size = 0x2000, scoped, tag = 'input window, operand 1']
    #allocation6 [shape = 's32[2]{0}', space=sflag, size = 0x8, scoped, tag = 'scoped memory for tpu_custom_call.1']
    #allocation7 [shape = 'u8[524288]{0}', space=vmem, size = 0x80000, scoped, tag = 'input window, operand 2, single buffered']
    #allocation8 [shape = 'u8[8192]{0}', space=vmem, size = 0x2000, scoped, tag = 'output window, operand 0']
    %9 = vsyncpa [#allocation3], 0
    %s10 = scalar_lea.sflag [#allocation3], 1
    %11 = vsyncpa %s10, 0
    %12 = vsyncpa [#allocation6], 0
    %s13 = scalar_lea.sflag [#allocation6], 1
    %14 = vsyncpa %s13, 0
    %15 = vsyncpa [#allocation4], 0
    %s16 = scalar_lea.sflag [#allocation4], 1
    %17 = vsyncpa %s16, 0
    loop: start=0, step=1, limit=4
    $region2: #{tpu_custom_call.1} parent=1 // loop_pre_header
      _
    $region3: #{tpu_custom_call.1} parent=1 // loop_header
      %s19 = sphi 0, %s23
      %p20 = scmp.ge.s32.totalorder %s19, 4
      %s29 = sphi 0, %s31
      %s32 = sphi 0, %s29
      %s33 = sphi 0, %s32
      %s49 = sphi 0, %s33
      %s55 = sphi 0, %s57
      %s58 = sphi 0, %s55
      %s59 = sphi 0, %s58
      %s75 = sphi 0, %s59
      %s79 = sphi 0, %s79
      %s81 = sphi 0, %s79
      %s82 = sphi 0, %s81
      %s96 = sphi 0, %s82
      %s100 = sphi 0, %s100
      %s102 = sphi 0, %s100
      %s103 = sphi 0, %s102
      %s117 = sphi 0, %s103
      %s123 = sphi 0, %s125
      %s126 = sphi 0, %s123
      %s127 = sphi 0, %s126
      %s143 = sphi 0, %s127
    $region4: #{tpu_custom_call.1} parent=1 // loop_header_branch
      %22 = sbr.rel (%p20) target = $region8
    $region5: #{tpu_custom_call.1} parent=1 // loop_body
      %s24 = ssub.s32 %s19, 1
      %s25 = ssub.s32 %s19, 2
      %s26 = sadd.s32 %s19, 1
      %s27 = ssub.s32 %s19, %s26
      %p28 = scmp.eq.s32.totalorder %s27, 0
      %s30 = sadd.s32 %s29, 1
      %s31 = scalar_select %p28, %s29, %s30
      %p34 = pneg %p28
      %p35 = scmp.eq.s32.totalorder %s19, 1
      %p36 = por %p34, %p35
      %p37 = scmp.ne.s32.totalorder %s29, %s32
      %p38 = scmp.eq.s32.totalorder %s19, 0
      %p39 = por %p37, %p38
      %p40 = scmp.ne.s32.totalorder %s29, %s32
      %p41 = scmp.eq.s32.totalorder %s24, 1
      %p42 = por %p40, %p41
      %p43 = scmp.ne.s32.totalorder %s32, %s33
      %p44 = scmp.eq.s32.totalorder %s24, 0
      %p45 = por %p43, %p44
      %p46 = scmp.ne.s32.totalorder %s32, %s33
      %p47 = scmp.eq.s32.totalorder %s25, 1
      %p48 = por %p46, %p47
      %p50 = scmp.ne.s32.totalorder %s33, %s49
      %p51 = scmp.eq.s32.totalorder %s25, 0
      %p52 = por %p50, %p51
      %s53 = ssub.s32 %s19, %s26
      %p54 = scmp.eq.s32.totalorder %s53, 0
      %s56 = sadd.s32 %s55, 1
      %s57 = scalar_select %p54, %s55, %s56
      %p60 = pneg %p54
      %p61 = scmp.eq.s32.totalorder %s19, 1
      %p62 = por %p60, %p61
      %p63 = scmp.ne.s32.totalorder %s55, %s58
      %p64 = scmp.eq.s32.totalorder %s19, 0
      %p65 = por %p63, %p64
      %p66 = scmp.ne.s32.totalorder %s55, %s58
      %p67 = scmp.eq.s32.totalorder %s24, 1
      %p68 = por %p66, %p67
      %p69 = scmp.ne.s32.totalorder %s58, %s59
      %p70 = scmp.eq.s32.totalorder %s24, 0
      %p71 = por %p69, %p70
      %p72 = scmp.ne.s32.totalorder %s58, %s59
      %p73 = scmp.eq.s32.totalorder %s25, 1
      %p74 = por %p72, %p73
      %p76 = scmp.ne.s32.totalorder %s59, %s75
      %p77 = scmp.eq.s32.totalorder %s25, 0
      %p78 = por %p76, %p77
      %s80 = sadd.s32 %s79, 1
      %p83 = scmp.eq.s32.totalorder %s19, 1
      %p84 = scmp.ne.s32.totalorder %s79, %s81
      %p85 = scmp.eq.s32.totalorder %s19, 0
      %p86 = por %p84, %p85
      %p87 = scmp.ne.s32.totalorder %s79, %s81
      %p88 = scmp.eq.s32.totalorder %s24, 1
      %p89 = por %p87, %p88
      %p90 = scmp.ne.s32.totalorder %s81, %s82
      %p91 = scmp.eq.s32.totalorder %s24, 0
      %p92 = por %p90, %p91
      %p93 = scmp.ne.s32.totalorder %s81, %s82
      %p94 = scmp.eq.s32.totalorder %s25, 1
      %p95 = por %p93, %p94
      %p97 = scmp.ne.s32.totalorder %s82, %s96
      %p98 = scmp.eq.s32.totalorder %s25, 0
      %p99 = por %p97, %p98
      %s101 = sadd.s32 %s100, 1
      %p104 = scmp.eq.s32.totalorder %s19, 1
      %p105 = scmp.ne.s32.totalorder %s100, %s102
      %p106 = scmp.eq.s32.totalorder %s19, 0
      %p107 = por %p105, %p106
      %p108 = scmp.ne.s32.totalorder %s100, %s102
      %p109 = scmp.eq.s32.totalorder %s24, 1
      %p110 = por %p108, %p109
      %p111 = scmp.ne.s32.totalorder %s102, %s103
      %p112 = scmp.eq.s32.totalorder %s24, 0
      %p113 = por %p111, %p112
      %p114 = scmp.ne.s32.totalorder %s102, %s103
      %p115 = scmp.eq.s32.totalorder %s25, 1
      %p116 = por %p114, %p115
      %p118 = scmp.ne.s32.totalorder %s103, %s117
      %p119 = scmp.eq.s32.totalorder %s25, 0
      %p120 = por %p118, %p119
      %s121 = ssub.s32 %s19, %s26
      %p122 = scmp.eq.s32.totalorder %s121, 0
      %s124 = sadd.s32 %s123, 1
      %s125 = scalar_select %p122, %s123, %s124
      %p128 = pneg %p122
      %p129 = scmp.eq.s32.totalorder %s19, 1
      %p130 = por %p128, %p129
      %p131 = scmp.ne.s32.totalorder %s123, %s126
      %p132 = scmp.eq.s32.totalorder %s19, 0
      %p133 = por %p131, %p132
      %p134 = scmp.ne.s32.totalorder %s123, %s126
      %p135 = scmp.eq.s32.totalorder %s24, 1
      %p136 = por %p134, %p135
      %p137 = scmp.ne.s32.totalorder %s126, %s127
      %p138 = scmp.eq.s32.totalorder %s24, 0
      %p139 = por %p137, %p138
      %p140 = scmp.ne.s32.totalorder %s126, %s127
      %p141 = scmp.eq.s32.totalorder %s25, 1
      %p142 = por %p140, %p141
      %p144 = scmp.ne.s32.totalorder %s127, %s143
      %p145 = scmp.eq.s32.totalorder %s25, 0
      %p146 = por %p144, %p145
      %p147 = scmp.le.s32.totalorder 1, %s19
      %p148 = scmp.lt.s32.totalorder %s19, 3
      %p149 = pnand %p147, %p148
      %p150 = pneg %p149
      // Predicated region
      $region9: #{tpu_custom_call.1} parent=5 // pred_check
        _
      $region10: #{tpu_custom_call.1} parent=5 // pred_check_branch
        %152 = sbr.rel (%p149) target = $region12
      $region11: #{tpu_custom_call.1} parent=5 // pred_region
        %s153 = ssub.s32 %s19, 1
        // Predicated region
        $region13: #{tpu_custom_call.1} parent=11 // pred_check
          %p154 = pneg %p92
        $region14: #{tpu_custom_call.1} parent=11 // pred_check_branch
          %156 = sbr.rel (%p154) target = $region16
        $region15: #{tpu_custom_call.1} parent=11 // pred_region
          %s158 = ssub.s32 16384, 16384
          %159 = vsyncadd [#allocation6], %s158
          %s160 = sshll.u32 [#allocation7], 4
          %s161 = int_to_ptr.vmem [resolvable:$true] %s160
          %166 = dma.hbm_to_vmem [thread:$0]  %s2, 16384, %s161, [#allocation6], 1024, 1024, 64
        $region16: #{tpu_custom_call.1} parent=11 // pred_fallthru
          _
        // Predicated region
        $region17: #{tpu_custom_call.1} parent=11 // pred_check
          %p167 = pneg %p113
        $region18: #{tpu_custom_call.1} parent=11 // pred_check_branch
          %169 = sbr.rel (%p167) target = $region20
        $region19: #{tpu_custom_call.1} parent=11 // pred_region
          _
        $region20: #{tpu_custom_call.1} parent=11 // pred_fallthru
          _
      $region12: #{tpu_custom_call.1} parent=5 // pred_fallthru
        _
      %p170 = scmp.lt.s32.totalorder %s19, 2
      // Predicated region
      $region21: #{tpu_custom_call.1} parent=5 // pred_check
        %p171 = pneg %p170
      $region22: #{tpu_custom_call.1} parent=5 // pred_check_branch
        %173 = sbr.rel (%p171) target = $region24
      $region23: #{tpu_custom_call.1} parent=5 // pred_region
        // Predicated region
        $region25: #{tpu_custom_call.1} parent=23 // pred_check
          %p174 = pneg %p39
        $region26: #{tpu_custom_call.1} parent=23 // pred_check_branch
          %176 = sbr.rel (%p174) target = $region28
        $region27: #{tpu_custom_call.1} parent=23 // pred_region
          %s177 = sand.u32 %s29, 1
          %s178 = scalar_lea.sflag [#allocation3], %s177
          %s179 = sand.u32 %s29, 1
          %s180 = smul.addr %s179, 8
          %s181 = scalar_lea.vmem [#allocation2], %s180
          %s183 = ssub.s32 128, 128
          %184 = vsyncadd %s178, %s183
          %s185 = smul.addr %s19, 128
          %s186 = scalar_lea.hbm %s0, %s185
          %s188 = sshll.u32 %s181, 4
          %s189 = int_to_ptr.vmem [resolvable:$true] %s188
          %191 = dma.hbm_to_vmem [thread:$0]  %s186, 128, %s189, %s178
        $region28: #{tpu_custom_call.1} parent=23 // pred_fallthru
          _
        // Predicated region
        $region29: #{tpu_custom_call.1} parent=23 // pred_check
          %p192 = pneg %p65
        $region30: #{tpu_custom_call.1} parent=23 // pred_check_branch
          %194 = sbr.rel (%p192) target = $region32
        $region31: #{tpu_custom_call.1} parent=23 // pred_region
          %s195 = sand.u32 %s19, 1
          %s196 = scalar_lea.sflag [#allocation6], %s195
          %s197 = sand.u32 %s55, 1
          %s198 = smul.addr %s197, 8
          %s199 = scalar_lea.vmem [#allocation5], %s198
          %s201 = ssub.s32 128, 128
          %202 = vsyncadd %s196, %s201
          %s203 = smul.addr %s19, 128
          %s204 = scalar_lea.hbm %s1, %s203
          %s206 = sshll.u32 %s199, 4
          %s207 = int_to_ptr.vmem [resolvable:$true] %s206
          %209 = dma.hbm_to_vmem [thread:$0]  %s204, 128, %s207, %s196
        $region32: #{tpu_custom_call.1} parent=23 // pred_fallthru
          _
      $region24: #{tpu_custom_call.1} parent=5 // pred_fallthru
        _
      %p210 = scmp.le.s32.totalorder 1, %s19
      %p211 = scmp.lt.s32.totalorder %s19, 3
      %p212 = pnand %p210, %p211
      %p213 = pneg %p212
      // Predicated region
      $region33: #{tpu_custom_call.1} parent=5 // pred_check
        _
      $region34: #{tpu_custom_call.1} parent=5 // pred_check_branch
        %215 = sbr.rel (%p212) target = $region36
      $region35: #{tpu_custom_call.1} parent=5 // pred_region
        %s216 = ssub.s32 %s19, 1
        %s217 = sand.u32 %s32, 1
        %s218 = scalar_lea.sflag [#allocation3], %s217
        %s219 = sand.u32 %s32, 1
        %s220 = smul.addr %s219, 8
        %s221 = scalar_lea.vmem [#allocation2], %s220
        // Predicated region
        $region37: #{tpu_custom_call.1} parent=35 // pred_check
          %p222 = pneg %p45
        $region38: #{tpu_custom_call.1} parent=35 // pred_check_branch
          %224 = sbr.rel (%p222) target = $region40
        $region39: #{tpu_custom_call.1} parent=35 // pred_region
          %225 = dma.done %s218, 128
        $region40: #{tpu_custom_call.1} parent=35 // pred_fallthru
          _
        %s226 = sand.u32 %s24, 1
        %s227 = scalar_lea.sflag [#allocation6], %s226
        %s228 = sand.u32 %s58, 1
        %s229 = smul.addr %s228, 8
        %s230 = scalar_lea.vmem [#allocation5], %s229
        // Predicated region
        $region41: #{tpu_custom_call.1} parent=35 // pred_check
          %p231 = pneg %p71
        $region42: #{tpu_custom_call.1} parent=35 // pred_check_branch
          %233 = sbr.rel (%p231) target = $region44
        $region43: #{tpu_custom_call.1} parent=35 // pred_region
          %234 = dma.done %s227, 128
        $region44: #{tpu_custom_call.1} parent=35 // pred_fallthru
          _
        // Predicated region
        $region45: #{tpu_custom_call.1} parent=35 // pred_check
          %p235 = pneg %p92
        $region46: #{tpu_custom_call.1} parent=35 // pred_check_branch
          %237 = sbr.rel (%p235) target = $region48
        $region47: #{tpu_custom_call.1} parent=35 // pred_region
          %238 = dma.done [#allocation6], 16384
        $region48: #{tpu_custom_call.1} parent=35 // pred_fallthru
          _
        %s239 = sand.u32 %s32, 1
        %s240 = scalar_lea.sflag [#allocation3], %s239
        %s241 = sand.u32 %s32, 1
        %s242 = smul.addr %s241, 8
        %s243 = scalar_lea.vmem [#allocation2], %s242
        %p244 = pneg %p45
        %p245 = pneg %p42
        %s246 = sand.u32 %s24, 1
        %s247 = scalar_lea.sflag [#allocation6], %s246
        %s248 = sand.u32 %s58, 1
        %s249 = smul.addr %s248, 8
        %s250 = scalar_lea.vmem [#allocation5], %s249
        %p251 = pneg %p71
        %p252 = pneg %p68
        %p253 = pneg %p92
        %p254 = pneg %p89
        %p255 = pneg %p113
        %p256 = pneg %p110
        %p257 = pneg %p139
        %p258 = pneg %p136
        %s259 = sand.u32 %s126, 1
        %s260 = scalar_lea.sflag [#allocation4], %s259
        %s261 = sand.u32 %s126, 1
        %s262 = smul.addr %s261, 8
        %s263 = scalar_lea.vmem [#allocation8], %s262
        %v264 = vld [vmem:[%s230] sm:$0xff]
        %v265 = vld [vmem:[%s221] sm:$0xff]
        %v266 = vld [vmem:[#allocation7] sm:$0xff]
        %v267 = vld [vmem:[#allocation7 + $0x8] sm:$0xff]
        %v268 = vld [vmem:[#allocation7 + $0x10] sm:$0xff]
        %v269 = vld [vmem:[#allocation7 + $0x40] sm:$0xff]
        %v270 = vld [vmem:[#allocation7 + $0x48] sm:$0xff]
        %v271 = vld [vmem:[#allocation7 + $0x50] sm:$0xff]
        %v272 = vld [vmem:[#allocation7 + $0x80] sm:$0xff]
        %v273 = vld [vmem:[#allocation7 + $0x88] sm:$0xff]
        %v274 = vld [vmem:[#allocation7 + $0x90] sm:$0xff]
        %v275 = vld [vmem:[#allocation7 + $0xc0] sm:$0xff]
        %v276 = vld [vmem:[#allocation7 + $0xc8] sm:$0xff]
        %v277 = vld [vmem:[#allocation7 + $0xd0] sm:$0xff]
        %v278 = vld [vmem:[#allocation7 + $0x100] sm:$0xff]
        %v279 = vld [vmem:[#allocation7 + $0x108] sm:$0xff]
        %v280 = vld [vmem:[#allocation7 + $0x110] sm:$0xff]
        %v281 = vld [vmem:[#allocation7 + $0x140] sm:$0xff]
        %v282 = vld [vmem:[#allocation7 + $0x148] sm:$0xff]
        %v283 = vld [vmem:[#allocation7 + $0x150] sm:$0xff]
        %v284 = vld [vmem:[#allocation7 + $0x180] sm:$0xff]
        %v285 = vld [vmem:[#allocation7 + $0x188] sm:$0xff]
        %v286 = vld [vmem:[#allocation7 + $0x190] sm:$0xff]
        %v287 = vld [vmem:[#allocation7 + $0x1c0] sm:$0xff]
        %v288 = vld [vmem:[#allocation7 + $0x1c8] sm:$0xff]
        %v289 = vld [vmem:[#allocation7 + $0x1d0] sm:$0xff]
        %v290 = vld [vmem:[#allocation7 + $0x200] sm:$0xff]
        %v291 = vld [vmem:[#allocation7 + $0x208] sm:$0xff]
        %v292 = vld [vmem:[#allocation7 + $0x210] sm:$0xff]
        %v293 = vld [vmem:[#allocation7 + $0x240] sm:$0xff]
        %v294 = vld [vmem:[#allocation7 + $0x248] sm:$0xff]
        %v295 = vld [vmem:[#allocation7 + $0x250] sm:$0xff]
        %v296 = vld [vmem:[#allocation7 + $0x280] sm:$0xff]
        %v297 = vld [vmem:[#allocation7 + $0x288] sm:$0xff]
        %v298 = vld [vmem:[#allocation7 + $0x290] sm:$0xff]
        %v299 = vld [vmem:[#allocation7 + $0x2c0] sm:$0xff]
        %v300 = vld [vmem:[#allocation7 + $0x2c8] sm:$0xff]
        %v301 = vld [vmem:[#allocation7 + $0x2d0] sm:$0xff]
        %v302 = vld [vmem:[#allocation7 + $0x300] sm:$0xff]
        %v303 = vld [vmem:[#allocation7 + $0x308] sm:$0xff]
        %v304 = vld [vmem:[#allocation7 + $0x310] sm:$0xff]
        %v305 = vld [vmem:[#allocation7 + $0x340] sm:$0xff]
        %v306 = vld [vmem:[#allocation7 + $0x348] sm:$0xff]
        %v307 = vld [vmem:[#allocation7 + $0x350] sm:$0xff]
        %v308 = vld [vmem:[#allocation7 + $0x380] sm:$0xff]
        %v309 = vld [vmem:[#allocation7 + $0x388] sm:$0xff]
        %v310 = vld [vmem:[#allocation7 + $0x390] sm:$0xff]
        %v311 = vld [vmem:[#allocation7 + $0x3c0] sm:$0xff]
        %v312 = vld [vmem:[#allocation7 + $0x3c8] sm:$0xff]
        %v313 = vld [vmem:[#allocation7 + $0x3d0] sm:$0xff]
        %314 = vmatprep.subr.mxu0 %v267
        %315 = vmatpush1.msra.mxu0 %v266
        %316 = vmatprep.subr.mxu0 %v270
        %317 = vmatpush1.msra.mxu0 %v269
        %318 = vmatprep.subr.mxu0 %v273
        %319 = vmatpush1.msra.mxu0 %v272
        %320 = vmatprep.subr.mxu0 %v276
        %321 = vmatpush1.msra.mxu0 %v275
        %322 = vmatprep.subr.mxu0 %v279
        %323 = vmatpush1.msra.mxu0 %v278
        %324 = vmatprep.subr.mxu0 %v282
        %325 = vmatpush1.msra.mxu0 %v281
        %326 = vmatprep.subr.mxu0 %v285
        %327 = vmatpush1.msra.mxu0 %v284
        %328 = vmatprep.subr.mxu0 %v288
        %329 = vmatpush1.msra.mxu0 %v287
        %330 = vmatprep.subr.mxu0 %v291
        %331 = vmatpush1.msra.mxu0 %v290
        %332 = vmatprep.subr.mxu0 %v294
        %333 = vmatpush1.msra.mxu0 %v293
        %334 = vmatprep.subr.mxu0 %v297
        %335 = vmatpush1.msra.mxu0 %v296
        %336 = vmatprep.subr.mxu0 %v300
        %337 = vmatpush1.msra.mxu0 %v299
        %338 = vmatprep.subr.mxu0 %v303
        %339 = vmatpush1.msra.mxu0 %v302
        %340 = vmatprep.subr.mxu0 %v306
        %341 = vmatpush1.msra.mxu0 %v305
        %342 = vmatprep.subr.mxu0 %v309
        %343 = vmatpush1.msra.mxu0 %v308
        %344 = vmatprep.subr.mxu0 %v312
        %345 = vmatpush1.msra.mxu0 %v311
        %346 = vmatprep.subr.mxu0 0.0
        %347 = vmatpush1.msra.mxu0 0.0
        %348 = vmatprep.subr.mxu0 0.0
        %349 = vmatpush1.msra.mxu0 0.0
        %350 = vmatprep.subr.mxu0 0.0
        %351 = vmatpush1.msra.mxu0 0.0
        %352 = vmatprep.subr.mxu0 0.0
        %353 = vmatpush1.msra.mxu0 0.0
        %354 = vmatprep.subr.mxu0 0.0
        %355 = vmatpush1.msra.mxu0 0.0
        %356 = vmatprep.subr.mxu0 0.0
        %357 = vmatpush1.msra.mxu0 0.0
        %358 = vmatprep.subr.mxu0 0.0
        %359 = vmatpush1.msra.mxu0 0.0
        %360 = vmatprep.subr.mxu0 0.0
        %361 = vmatpush1.msra.mxu0 0.0
        %362 = vmatprep.subr.mxu0 0.0
        %363 = vmatpush1.msra.mxu0 0.0
        %364 = vmatprep.subr.mxu0 0.0
        %365 = vmatpush1.msra.mxu0 0.0
        %366 = vmatprep.subr.mxu0 0.0
        %367 = vmatpush1.msra.mxu0 0.0
        %368 = vmatprep.subr.mxu0 0.0
        %369 = vmatpush1.msra.mxu0 0.0
        %370 = vmatprep.subr.mxu0 0.0
        %371 = vmatpush1.msra.mxu0 0.0
        %372 = vmatprep.subr.mxu0 0.0
        %373 = vmatpush1.msra.mxu0 0.0
        %374 = vmatprep.subr.mxu0 0.0
        %375 = vmatpush1.msra.mxu0 0.0
        %376 = vmatprep.subr.mxu0 0.0
        %377 = vmatpush1.msra.mxu0 0.0
        %378 = vmatprep.mubr.f32.mxu0 0.0
        %379 = vmatmul.mubr.f32.gmra.mrb[0].mxu0 %v264
        %v380 = vpop.f32.mrb[0].mxu0
        %v381 = vadd.f32 0.0, %v380
        %v382 = vpop.f32.mrb[0].mxu0
        %v383 = vadd.f32 0.0, %v382
        %384 = vdwg.mxu0
        %385 = vmatprep.subr.mxu0 0.0
        %386 = vmatpush1.msra.mxu0 %v268
        %387 = vmatprep.subr.mxu0 0.0
        %388 = vmatpush1.msra.mxu0 %v271
        %389 = vmatprep.subr.mxu0 0.0
        %390 = vmatpush1.msra.mxu0 %v274
        %391 = vmatprep.subr.mxu0 0.0
        %392 = vmatpush1.msra.mxu0 %v277
        %393 = vmatprep.subr.mxu0 0.0
        %394 = vmatpush1.msra.mxu0 %v280
        %395 = vmatprep.subr.mxu0 0.0
        %396 = vmatpush1.msra.mxu0 %v283
        %397 = vmatprep.subr.mxu0 0.0
        %398 = vmatpush1.msra.mxu0 %v286
        %399 = vmatprep.subr.mxu0 0.0
        %400 = vmatpush1.msra.mxu0 %v289
        %401 = vmatprep.subr.mxu0 0.0
        %402 = vmatpush1.msra.mxu0 %v292
        %403 = vmatprep.subr.mxu0 0.0
        %404 = vmatpush1.msra.mxu0 %v295
        %405 = vmatprep.subr.mxu0 0.0
        %406 = vmatpush1.msra.mxu0 %v298
        %407 = vmatprep.subr.mxu0 0.0
        %408 = vmatpush1.msra.mxu0 %v301
        %409 = vmatprep.subr.mxu0 0.0
        %410 = vmatpush1.msra.mxu0 %v304
        %411 = vmatprep.subr.mxu0 0.0
        %412 = vmatpush1.msra.mxu0 %v307
        %413 = vmatprep.subr.mxu0 0.0
        %414 = vmatpush1.msra.mxu0 %v310
        %415 = vmatprep.subr.mxu0 0.0
        %416 = vmatpush1.msra.mxu0 %v313
        %417 = vmatprep.subr.mxu0 0.0
        %418 = vmatpush1.msra.mxu0 0.0
        %419 = vmatprep.subr.mxu0 0.0
        %420 = vmatpush1.msra.mxu0 0.0
        %421 = vmatprep.subr.mxu0 0.0
        %422 = vmatpush1.msra.mxu0 0.0
        %423 = vmatprep.subr.mxu0 0.0
        %424 = vmatpush1.msra.mxu0 0.0
        %425 = vmatprep.subr.mxu0 0.0
        %426 = vmatpush1.msra.mxu0 0.0
        %427 = vmatprep.subr.mxu0 0.0
        %428 = vmatpush1.msra.mxu0 0.0
        %429 = vmatprep.subr.mxu0 0.0
        %430 = vmatpush1.msra.mxu0 0.0
        %431 = vmatprep.subr.mxu0 0.0
        %432 = vmatpush1.msra.mxu0 0.0
        %433 = vmatprep.subr.mxu0 0.0
        %434 = vmatpush1.msra.mxu0 0.0
        %435 = vmatprep.subr.mxu0 0.0
        %436 = vmatpush1.msra.mxu0 0.0
        %437 = vmatprep.subr.mxu0 0.0
        %438 = vmatpush1.msra.mxu0 0.0
        %439 = vmatprep.subr.mxu0 0.0
        %440 = vmatpush1.msra.mxu0 0.0
        %441 = vmatprep.subr.mxu0 0.0
        %442 = vmatpush1.msra.mxu0 0.0
        %443 = vmatprep.subr.mxu0 0.0
        %444 = vmatpush1.msra.mxu0 0.0
        %445 = vmatprep.subr.mxu0 0.0
        %446 = vmatpush1.msra.mxu0 0.0
        %447 = vmatprep.subr.mxu0 0.0
        %448 = vmatpush1.msra.mxu0 0.0
        %449 = vmatprep.mubr.f32.mxu0 0.0
        %450 = vmatmul.mubr.f32.gmra.mrb[0].mxu0 %v264
        %v451 = vpop.f32.mrb[0].mxu0
        %v452 = vadd.f32 0.0, %v451
        %v453 = vpop.f32.mrb[0].mxu0
        %454 = vdwg.mxu0
        %v455 = vld [vmem:[#allocation7 + $0x18] sm:$0xff]
        %v456 = vld [vmem:[#allocation7 + $0x58] sm:$0xff]
        %v457 = vld [vmem:[#allocation7 + $0x98] sm:$0xff]
        %v458 = vld [vmem:[#allocation7 + $0xd8] sm:$0xff]
        %v459 = vld [vmem:[#allocation7 + $0x118] sm:$0xff]
        %v460 = vld [vmem:[#allocation7 + $0x158] sm:$0xff]
        %v461 = vld [vmem:[#allocation7 + $0x198] sm:$0xff]
        %v462 = vld [vmem:[#allocation7 + $0x1d8] sm:$0xff]
        %v463 = vld [vmem:[#allocation7 + $0x218] sm:$0xff]
        %v464 = vld [vmem:[#allocation7 + $0x258] sm:$0xff]
        %v465 = vld [vmem:[#allocation7 + $0x298] sm:$0xff]
        %v466 = vld [vmem:[#allocation7 + $0x2d8] sm:$0xff]
        %v467 = vld [vmem:[#allocation7 + $0x318] sm:$0xff]
        %v468 = vld [vmem:[#allocation7 + $0x358] sm:$0xff]
        %v469 = vld [vmem:[#allocation7 + $0x398] sm:$0xff]
        %v470 = vld [vmem:[#allocation7 + $0x3d8] sm:$0xff]
        %v471 = vld [vmem:[%s3] sm:$0x1]
        %v472 = vld [vmem:[%s3 + $0x1] sm:$0x1]
        %473 = vmatprep.subr.mxu0 0.0
        %474 = vmatpush1.xpose.msra.mxu0 %v383
        %475 = vmatprep.subr.mxu0 0.0
        %476 = vmatpush1.xpose.msra.mxu0 0.0
        %477 = vmatprep.subr.mxu0 0.0
        %478 = vmatpush1.xpose.msra.mxu0 0.0
        %479 = vmatprep.subr.mxu0 0.0
        %480 = vmatpush1.xpose.msra.mxu0 0.0
        %481 = vmatprep.subr.mxu0 0.0
        %482 = vmatpush1.xpose.msra.mxu0 0.0
        %483 = vmatprep.subr.mxu0 0.0
        %484 = vmatpush1.xpose.msra.mxu0 0.0
        %485 = vmatprep.subr.mxu0 0.0
        %486 = vmatpush1.xpose.msra.mxu0 0.0
        %487 = vmatprep.subr.mxu0 0.0
        %488 = vmatpush1.xpose.msra.mxu0 0.0
        %489 = vmatprep.subr.mxu0 0.0
        %490 = vmatpush1.xpose.msra.mxu0 0.0
        %491 = vmatprep.subr.mxu0 0.0
        %492 = vmatpush1.xpose.msra.mxu0 0.0
        %493 = vmatprep.subr.mxu0 0.0
        %494 = vmatpush1.xpose.msra.mxu0 0.0
        %495 = vmatprep.subr.mxu0 0.0
        %496 = vmatpush1.xpose.msra.mxu0 0.0
        %497 = vmatprep.subr.mxu0 0.0
        %498 = vmatpush1.xpose.msra.mxu0 0.0
        %499 = vmatprep.subr.mxu0 0.0
        %500 = vmatpush1.xpose.msra.mxu0 0.0
        %501 = vmatprep.subr.mxu0 0.0
        %502 = vmatpush1.xpose.msra.mxu0 0.0
        %503 = vmatprep.subr.mxu0 0.0
        %504 = vmatpush1.xpose.msra.mxu0 0.0
        %505 = vmatprep.subr.mxu0 0.0
        %506 = vmatpush1.xpose.msra.mxu0 0.0
        %507 = vmatprep.subr.mxu0 0.0
        %508 = vmatpush1.xpose.msra.mxu0 0.0
        %509 = vmatprep.subr.mxu0 0.0
        %510 = vmatpush1.xpose.msra.mxu0 0.0
        %511 = vmatprep.subr.mxu0 0.0
        %512 = vmatpush1.xpose.msra.mxu0 0.0
        %513 = vmatprep.subr.mxu0 0.0
        %514 = vmatpush1.xpose.msra.mxu0 0.0
        %515 = vmatprep.subr.mxu0 0.0
        %516 = vmatpush1.xpose.msra.mxu0 0.0
        %517 = vmatprep.subr.mxu0 0.0
        %518 = vmatpush1.xpose.msra.mxu0 0.0
        %519 = vmatprep.subr.mxu0 0.0
        %520 = vmatpush1.xpose.msra.mxu0 0.0
        %521 = vmatprep.subr.mxu0 0.0
        %522 = vmatpush1.xpose.msra.mxu0 0.0
        %523 = vmatprep.subr.mxu0 0.0
        %524 = vmatpush1.xpose.msra.mxu0 0.0
        %525 = vmatprep.subr.mxu0 0.0
        %526 = vmatpush1.xpose.msra.mxu0 0.0
        %527 = vmatprep.subr.mxu0 0.0
        %528 = vmatpush1.xpose.msra.mxu0 0.0
        %529 = vmatprep.subr.mxu0 0.0
        %530 = vmatpush1.xpose.msra.mxu0 0.0
        %531 = vmatprep.subr.mxu0 0.0
        %532 = vmatpush1.xpose.msra.mxu0 0.0
        %533 = vmatprep.subr.mxu0 0.0
        %534 = vmatpush1.xpose.msra.mxu0 0.0
        %535 = vmatprep.subr.mxu0 0.0
        %536 = vmatpush1.xpose.msra.mxu0 0.0
        %537 = vmatprep.mubr.f32.mxu0 0.0
        %538 = vmatmul.mubr.f32.gmra.mrb[0].mxu0 %v381
        %v539 = vpop.f32.mrb[0].mxu0
        %v540 = vadd.f32 0.0, %v539
        %v541 = vpop.f32.mrb[0].mxu0
        %542 = vdwg.mxu0
        %vm543 = vcmask 64512
        %v544 = vsel %vm543, %v540, -inf
        %545 = vmax.xlane.f32.xlu0 %v544
        %v546 = vpop.xlane.xlu0 %545
        %v547 = vsub.f32 %v540, %v546
        %v548 = vmul.f32 %v547, 1.442695
        %v549 = vpow.pop %v548
        %v550 = vsel %vm543, %v549, 0.0
        %551 = vadd.xlane.f32.xlu0 %v550
        %v552 = vpop.xlane.xlu0 %551
        %v553 = vrcp.pop %v552
        %v554 = vmul.f32 %v549, %v553
        %v556 = vsel %vm543, %v554, 0
        %558 = vmatprep.subr.mxu0 0.0
        %559 = vmatpush1.msra.mxu0 %v452
        %560 = vmatprep.subr.mxu0 0.0
        %561 = vmatpush1.msra.mxu0 0.0
        %562 = vmatprep.subr.mxu0 0.0
        %563 = vmatpush1.msra.mxu0 0.0
        %564 = vmatprep.subr.mxu0 0.0
        %565 = vmatpush1.msra.mxu0 0.0
        %566 = vmatprep.subr.mxu0 0.0
        %567 = vmatpush1.msra.mxu0 0.0
        %568 = vmatprep.subr.mxu0 0.0
        %569 = vmatpush1.msra.mxu0 0.0
        %570 = vmatprep.subr.mxu0 0.0
        %571 = vmatpush1.msra.mxu0 0.0
        %572 = vmatprep.subr.mxu0 0.0
        %573 = vmatpush1.msra.mxu0 0.0
        %574 = vmatprep.subr.mxu0 0.0
        %575 = vmatpush1.msra.mxu0 0.0
        %576 = vmatprep.subr.mxu0 0.0
        %577 = vmatpush1.msra.mxu0 0.0
        %578 = vmatprep.subr.mxu0 0.0
        %579 = vmatpush1.msra.mxu0 0.0
        %580 = vmatprep.subr.mxu0 0.0
        %581 = vmatpush1.msra.mxu0 0.0
        %582 = vmatprep.subr.mxu0 0.0
        %583 = vmatpush1.msra.mxu0 0.0
        %584 = vmatprep.subr.mxu0 0.0
        %585 = vmatpush1.msra.mxu0 0.0
        %586 = vmatprep.subr.mxu0 0.0
        %587 = vmatpush1.msra.mxu0 0.0
        %588 = vmatprep.subr.mxu0 0.0
        %589 = vmatpush1.msra.mxu0 0.0
        %590 = vmatprep.subr.mxu0 0.0
        %591 = vmatpush1.msra.mxu0 0.0
        %592 = vmatprep.subr.mxu0 0.0
        %593 = vmatpush1.msra.mxu0 0.0
        %594 = vmatprep.subr.mxu0 0.0
        %595 = vmatpush1.msra.mxu0 0.0
        %596 = vmatprep.subr.mxu0 0.0
        %597 = vmatpush1.msra.mxu0 0.0
        %598 = vmatprep.subr.mxu0 0.0
        %599 = vmatpush1.msra.mxu0 0.0
        %600 = vmatprep.subr.mxu0 0.0
        %601 = vmatpush1.msra.mxu0 0.0
        %602 = vmatprep.subr.mxu0 0.0
        %603 = vmatpush1.msra.mxu0 0.0
        %604 = vmatprep.subr.mxu0 0.0
        %605 = vmatpush1.msra.mxu0 0.0
        %606 = vmatprep.subr.mxu0 0.0
        %607 = vmatpush1.msra.mxu0 0.0
        %608 = vmatprep.subr.mxu0 0.0
        %609 = vmatpush1.msra.mxu0 0.0
        %610 = vmatprep.subr.mxu0 0.0
        %611 = vmatpush1.msra.mxu0 0.0
        %612 = vmatprep.subr.mxu0 0.0
        %613 = vmatpush1.msra.mxu0 0.0
        %614 = vmatprep.subr.mxu0 0.0
        %615 = vmatpush1.msra.mxu0 0.0
        %616 = vmatprep.subr.mxu0 0.0
        %617 = vmatpush1.msra.mxu0 0.0
        %618 = vmatprep.subr.mxu0 0.0
        %619 = vmatpush1.msra.mxu0 0.0
        %620 = vmatprep.subr.mxu0 0.0
        %621 = vmatpush1.msra.mxu0 0.0
        %622 = vmatprep.mubr.f32.mxu0 0.0
        %623 = vmatmul.mubr.f32.gmra.mrb[0].mxu0 %v556
        %v624 = vpop.f32.mrb[0].mxu0
        %v625 = vadd.f32 0.0, %v624
        %v626 = vpop.f32.mrb[0].mxu0
        %627 = vdwg.mxu0
        %628 = vmatprep.subr.mxu0 0.0
        %629 = vmatpush1.msra.mxu0 %v455
        %630 = vmatprep.subr.mxu0 0.0
        %631 = vmatpush1.msra.mxu0 %v456
        %632 = vmatprep.subr.mxu0 0.0
        %633 = vmatpush1.msra.mxu0 %v457
        %634 = vmatprep.subr.mxu0 0.0
        %635 = vmatpush1.msra.mxu0 %v458
        %636 = vmatprep.subr.mxu0 0.0
        %637 = vmatpush1.msra.mxu0 %v459
        %638 = vmatprep.subr.mxu0 0.0
        %639 = vmatpush1.msra.mxu0 %v460
        %640 = vmatprep.subr.mxu0 0.0
        %641 = vmatpush1.msra.mxu0 %v461
        %642 = vmatprep.subr.mxu0 0.0
        %643 = vmatpush1.msra.mxu0 %v462
        %644 = vmatprep.subr.mxu0 0.0
        %645 = vmatpush1.msra.mxu0 %v463
        %646 = vmatprep.subr.mxu0 0.0
        %647 = vmatpush1.msra.mxu0 %v464
        %648 = vmatprep.subr.mxu0 0.0
        %649 = vmatpush1.msra.mxu0 %v465
        %650 = vmatprep.subr.mxu0 0.0
        %651 = vmatpush1.msra.mxu0 %v466
        %652 = vmatprep.subr.mxu0 0.0
        %653 = vmatpush1.msra.mxu0 %v467
        %654 = vmatprep.subr.mxu0 0.0
        %655 = vmatpush1.msra.mxu0 %v468
        %656 = vmatprep.subr.mxu0 0.0
        %657 = vmatpush1.msra.mxu0 %v469
        %658 = vmatprep.subr.mxu0 0.0
        %659 = vmatpush1.msra.mxu0 %v470
        %660 = vmatprep.subr.mxu0 0.0
        %661 = vmatpush1.msra.mxu0 0.0
        %662 = vmatprep.subr.mxu0 0.0
        %663 = vmatpush1.msra.mxu0 0.0
        %664 = vmatprep.subr.mxu0 0.0
        %665 = vmatpush1.msra.mxu0 0.0
        %666 = vmatprep.subr.mxu0 0.0
        %667 = vmatpush1.msra.mxu0 0.0
        %668 = vmatprep.subr.mxu0 0.0
        %669 = vmatpush1.msra.mxu0 0.0
        %670 = vmatprep.subr.mxu0 0.0
        %671 = vmatpush1.msra.mxu0 0.0
        %672 = vmatprep.subr.mxu0 0.0
        %673 = vmatpush1.msra.mxu0 0.0
        %674 = vmatprep.subr.mxu0 0.0
        %675 = vmatpush1.msra.mxu0 0.0
        %676 = vmatprep.subr.mxu0 0.0
        %677 = vmatpush1.msra.mxu0 0.0
        %678 = vmatprep.subr.mxu0 0.0
        %679 = vmatpush1.msra.mxu0 0.0
        %680 = vmatprep.subr.mxu0 0.0
        %681 = vmatpush1.msra.mxu0 0.0
        %682 = vmatprep.subr.mxu0 0.0
        %683 = vmatpush1.msra.mxu0 0.0
        %684 = vmatprep.subr.mxu0 0.0
        %685 = vmatpush1.msra.mxu0 0.0
        %686 = vmatprep.subr.mxu0 0.0
        %687 = vmatpush1.msra.mxu0 0.0
        %688 = vmatprep.subr.mxu0 0.0
        %689 = vmatpush1.msra.mxu0 0.0
        %690 = vmatprep.subr.mxu0 0.0
        %691 = vmatpush1.msra.mxu0 0.0
        %692 = vmatprep.mubr.f32.mxu0 0.0
        %693 = vmatmul.mubr.f32.gmra.mrb[0].mxu0 %v625
        %v694 = vpop.f32.mrb[0].mxu0
        %v695 = vadd.f32 %v264, %v694
        %v696 = vpop.f32.mrb[0].mxu0
        %697 = vdwg.mxu0
        %698 = vadd.xlane.f32.xlu0 %v695
        %v699 = vpop.xlane.xlu0 %698
        %v700 = vmul.f32 %v695, %v695
        %701 = vadd.xlane.f32.xlu0 %v700
        %v702 = vpop.xlane.xlu0 %701
        %v703 = vmul.f32 %v699, 0.03125
        %v704 = vmul.f32 %v702, 0.03125
        %v705 = vmul.f32 %v703, %v703
        %v706 = vsub.f32 %v704, %v705
        %v707 = vsub.f32 %v695, %v703
        %v708 = vadd.f32 %v706, 1e-05
        %v709 = vrsqrt.pop %v708
        %v710 = vmul.f32 %v707, %v709
        %v711 = vlaneseq
        %v712 = vshrl.u32 %v711, 7
        %v713 = vsub.s32 0, %v712
        %v714 = vrot.slane %v471, %v713
        %v715 = vmul.f32 %v710, %v714
        %v716 = vlaneseq
        %v717 = vshrl.u32 %v716, 7
        %v718 = vsub.s32 0, %v717
        %v719 = vrot.slane %v472, %v718
        %v720 = vadd.f32 %v715, %v719
        %v721 = vld [vmem:[#allocation7 + $0x20] sm:$0xff]
        %v722 = vld [vmem:[#allocation7 + $0x60] sm:$0xff]
        %v723 = vld [vmem:[#allocation7 + $0xa0] sm:$0xff]
        %v724 = vld [vmem:[#allocation7 + $0xe0] sm:$0xff]
        %v725 = vld [vmem:[#allocation7 + $0x120] sm:$0xff]
        %v726 = vld [vmem:[#allocation7 + $0x160] sm:$0xff]
        %v727 = vld [vmem:[#allocation7 + $0x1a0] sm:$0xff]
        %v728 = vld [vmem:[#allocation7 + $0x1e0] sm:$0xff]
        %v729 = vld [vmem:[#allocation7 + $0x220] sm:$0xff]
        %v730 = vld [vmem:[#allocation7 + $0x260] sm:$0xff]
        %v731 = vld [vmem:[#allocation7 + $0x2a0] sm:$0xff]
        %v732 = vld [vmem:[#allocation7 + $0x2e0] sm:$0xff]
        %v733 = vld [vmem:[#allocation7 + $0x320] sm:$0xff]
        %v734 = vld [vmem:[#allocation7 + $0x360] sm:$0xff]
        %v735 = vld [vmem:[#allocation7 + $0x3a0] sm:$0xff]
        %v736 = vld [vmem:[#allocation7 + $0x3e0] sm:$0xff]
        %737 = vmatprep.subr.mxu0 0.0
        %738 = vmatpush1.msra.mxu0 %v721
        %739 = vmatprep.subr.mxu0 0.0
        %740 = vmatpush1.msra.mxu0 %v722
        %741 = vmatprep.subr.mxu0 0.0
        %742 = vmatpush1.msra.mxu0 %v723
        %743 = vmatprep.subr.mxu0 0.0
        %744 = vmatpush1.msra.mxu0 %v724
        %745 = vmatprep.subr.mxu0 0.0
        %746 = vmatpush1.msra.mxu0 %v725
        %747 = vmatprep.subr.mxu0 0.0
        %748 = vmatpush1.msra.mxu0 %v726
        %749 = vmatprep.subr.mxu0 0.0
        %750 = vmatpush1.msra.mxu0 %v727
        %751 = vmatprep.subr.mxu0 0.0
        %752 = vmatpush1.msra.mxu0 %v728
        %753 = vmatprep.subr.mxu0 0.0
        %754 = vmatpush1.msra.mxu0 %v729
        %755 = vmatprep.subr.mxu0 0.0
        %756 = vmatpush1.msra.mxu0 %v730
        %757 = vmatprep.subr.mxu0 0.0
        %758 = vmatpush1.msra.mxu0 %v731
        %759 = vmatprep.subr.mxu0 0.0
        %760 = vmatpush1.msra.mxu0 %v732
        %761 = vmatprep.subr.mxu0 0.0
        %762 = vmatpush1.msra.mxu0 %v733
        %763 = vmatprep.subr.mxu0 0.0
        %764 = vmatpush1.msra.mxu0 %v734
        %765 = vmatprep.subr.mxu0 0.0
        %766 = vmatpush1.msra.mxu0 %v735
        %767 = vmatprep.subr.mxu0 0.0
        %768 = vmatpush1.msra.mxu0 %v736
        %769 = vmatprep.subr.mxu0 0.0
        %770 = vmatpush1.msra.mxu0 0.0
        %771 = vmatprep.subr.mxu0 0.0
        %772 = vmatpush1.msra.mxu0 0.0
        %773 = vmatprep.subr.mxu0 0.0
        %774 = vmatpush1.msra.mxu0 0.0
        %775 = vmatprep.subr.mxu0 0.0
        %776 = vmatpush1.msra.mxu0 0.0
        %777 = vmatprep.subr.mxu0 0.0
        %778 = vmatpush1.msra.mxu0 0.0
        %779 = vmatprep.subr.mxu0 0.0
        %780 = vmatpush1.msra.mxu0 0.0
        %781 = vmatprep.subr.mxu0 0.0
        %782 = vmatpush1.msra.mxu0 0.0
        %783 = vmatprep.subr.mxu0 0.0
        %784 = vmatpush1.msra.mxu0 0.0
        %785 = vmatprep.subr.mxu0 0.0
        %786 = vmatpush1.msra.mxu0 0.0
        %787 = vmatprep.subr.mxu0 0.0
        %788 = vmatpush1.msra.mxu0 0.0
        %789 = vmatprep.subr.mxu0 0.0
        %790 = vmatpush1.msra.mxu0 0.0
        %791 = vmatprep.subr.mxu0 0.0
        %792 = vmatpush1.msra.mxu0 0.0
        %793 = vmatprep.subr.mxu0 0.0
        %794 = vmatpush1.msra.mxu0 0.0
        %795 = vmatprep.subr.mxu0 0.0
        %796 = vmatpush1.msra.mxu0 0.0
        %797 = vmatprep.subr.mxu0 0.0
        %798 = vmatpush1.msra.mxu0 0.0
        %799 = vmatprep.subr.mxu0 0.0
        %800 = vmatpush1.msra.mxu0 0.0
        %801 = vmatprep.mubr.f32.mxu0 0.0
        %802 = vmatmul.mubr.f32.gmra.mrb[0].mxu0 %v720
        %v803 = vpop.f32.mrb[0].mxu0
        %v804 = vadd.f32 0.0, %v803
        %v805 = vpop.f32.mrb[0].mxu0
        %806 = vdwg.mxu0
        %v807 = vld [vmem:[#allocation7 + $0x28] sm:$0xff]
        %v808 = vld [vmem:[#allocation7 + $0x30] sm:$0xff]
        %v809 = vld [vmem:[#allocation7 + $0x68] sm:$0xff]
        %v810 = vld [vmem:[#allocation7 + $0x70] sm:$0xff]
        %v811 = vld [vmem:[#allocation7 + $0xa8] sm:$0xff]
        %v812 = vld [vmem:[#allocation7 + $0xb0] sm:$0xff]
        %v813 = vld [vmem:[#allocation7 + $0xe8] sm:$0xff]
        %v814 = vld [vmem:[#allocation7 + $0xf0] sm:$0xff]
        %v815 = vld [vmem:[#allocation7 + $0x128] sm:$0xff]
        %v816 = vld [vmem:[#allocation7 + $0x130] sm:$0xff]
        %v817 = vld [vmem:[#allocation7 + $0x168] sm:$0xff]
        %v818 = vld [vmem:[#allocation7 + $0x170] sm:$0xff]
        %v819 = vld [vmem:[#allocation7 + $0x1a8] sm:$0xff]
        %v820 = vld [vmem:[#allocation7 + $0x1b0] sm:$0xff]
        %v821 = vld [vmem:[#allocation7 + $0x1e8] sm:$0xff]
        %v822 = vld [vmem:[#allocation7 + $0x1f0] sm:$0xff]
        %v823 = vld [vmem:[#allocation7 + $0x228] sm:$0xff]
        %v824 = vld [vmem:[#allocation7 + $0x230] sm:$0xff]
        %v825 = vld [vmem:[#allocation7 + $0x268] sm:$0xff]
        %v826 = vld [vmem:[#allocation7 + $0x270] sm:$0xff]
        %v827 = vld [vmem:[#allocation7 + $0x2a8] sm:$0xff]
        %v828 = vld [vmem:[#allocation7 + $0x2b0] sm:$0xff]
        %v829 = vld [vmem:[#allocation7 + $0x2e8] sm:$0xff]
        %v830 = vld [vmem:[#allocation7 + $0x2f0] sm:$0xff]
        %v831 = vld [vmem:[#allocation7 + $0x328] sm:$0xff]
        %v832 = vld [vmem:[#allocation7 + $0x330] sm:$0xff]
        %v833 = vld [vmem:[#allocation7 + $0x368] sm:$0xff]
        %v834 = vld [vmem:[#allocation7 + $0x370] sm:$0xff]
        %v835 = vld [vmem:[#allocation7 + $0x3a8] sm:$0xff]
        %v836 = vld [vmem:[#allocation7 + $0x3b0] sm:$0xff]
        %v837 = vld [vmem:[#allocation7 + $0x3e8] sm:$0xff]
        %v838 = vld [vmem:[#allocation7 + $0x3f0] sm:$0xff]
        %839 = vmatprep.subr.mxu0 %v808
        %840 = vmatpush1.msra.mxu0 %v807
        %841 = vmatprep.subr.mxu0 %v810
        %842 = vmatpush1.msra.mxu0 %v809
        %843 = vmatprep.subr.mxu0 %v812
        %844 = vmatpush1.msra.mxu0 %v811
        %845 = vmatprep.subr.mxu0 %v814
        %846 = vmatpush1.msra.mxu0 %v813
        %847 = vmatprep.subr.mxu0 %v816
        %848 = vmatpush1.msra.mxu0 %v815
        %849 = vmatprep.subr.mxu0 %v818
        %850 = vmatpush1.msra.mxu0 %v817
        %851 = vmatprep.subr.mxu0 %v820
        %852 = vmatpush1.msra.mxu0 %v819
        %853 = vmatprep.subr.mxu0 %v822
        %854 = vmatpush1.msra.mxu0 %v821
        %855 = vmatprep.subr.mxu0 %v824
        %856 = vmatpush1.msra.mxu0 %v823
        %857 = vmatprep.subr.mxu0 %v826
        %858 = vmatpush1.msra.mxu0 %v825
        %859 = vmatprep.subr.mxu0 %v828
        %860 = vmatpush1.msra.mxu0 %v827
        %861 = vmatprep.subr.mxu0 %v830
        %862 = vmatpush1.msra.mxu0 %v829
        %863 = vmatprep.subr.mxu0 %v832
        %864 = vmatpush1.msra.mxu0 %v831
        %865 = vmatprep.subr.mxu0 %v834
        %866 = vmatpush1.msra.mxu0 %v833
        %867 = vmatprep.subr.mxu0 %v836
        %868 = vmatpush1.msra.mxu0 %v835
        %869 = vmatprep.subr.mxu0 %v838
        %870 = vmatpush1.msra.mxu0 %v837
        %871 = vmatprep.subr.mxu0 0.0
        %872 = vmatpush1.msra.mxu0 0.0
        %873 = vmatprep.subr.mxu0 0.0
        %874 = vmatpush1.msra.mxu0 0.0
        %875 = vmatprep.subr.mxu0 0.0
        %876 = vmatpush1.msra.mxu0 0.0
        %877 = vmatprep.subr.mxu0 0.0
        %878 = vmatpush1.msra.mxu0 0.0
        %879 = vmatprep.subr.mxu0 0.0
        %880 = vmatpush1.msra.mxu0 0.0
        %881 = vmatprep.subr.mxu0 0.0
        %882 = vmatpush1.msra.mxu0 0.0
        %883 = vmatprep.subr.mxu0 0.0
        %884 = vmatpush1.msra.mxu0 0.0
        %885 = vmatprep.subr.mxu0 0.0
        %886 = vmatpush1.msra.mxu0 0.0
        %887 = vmatprep.subr.mxu0 0.0
        %888 = vmatpush1.msra.mxu0 0.0
        %889 = vmatprep.subr.mxu0 0.0
        %890 = vmatpush1.msra.mxu0 0.0
        %891 = vmatprep.subr.mxu0 0.0
        %892 = vmatpush1.msra.mxu0 0.0
        %893 = vmatprep.subr.mxu0 0.0
        %894 = vmatpush1.msra.mxu0 0.0
        %895 = vmatprep.subr.mxu0 0.0
        %896 = vmatpush1.msra.mxu0 0.0
        %897 = vmatprep.subr.mxu0 0.0
        %898 = vmatpush1.msra.mxu0 0.0
        %899 = vmatprep.subr.mxu0 0.0
        %900 = vmatpush1.msra.mxu0 0.0
        %901 = vmatprep.subr.mxu0 0.0
        %902 = vmatpush1.msra.mxu0 0.0
        %903 = vmatprep.mubr.f32.mxu0 0.0
        %904 = vmatmul.mubr.f32.gmra.mrb[0].mxu0 %v265
        %v905 = vpop.f32.mrb[0].mxu0
        %v906 = vadd.f32 0.0, %v905
        %v907 = vpop.f32.mrb[0].mxu0
        %v908 = vadd.f32 0.0, %v907
        %909 = vdwg.mxu0
        %v910 = vld [vmem:[#allocation7 + $0x38] sm:$0xff]
        %v911 = vld [vmem:[#allocation7 + $0x78] sm:$0xff]
        %v912 = vld [vmem:[#allocation7 + $0xb8] sm:$0xff]
        %v913 = vld [vmem:[#allocation7 + $0xf8] sm:$0xff]
        %v914 = vld [vmem:[#allocation7 + $0x138] sm:$0xff]
        %v915 = vld [vmem:[#allocation7 + $0x178] sm:$0xff]
        %v916 = vld [vmem:[#allocation7 + $0x1b8] sm:$0xff]
        %v917 = vld [vmem:[#allocation7 + $0x1f8] sm:$0xff]
        %v918 = vld [vmem:[#allocation7 + $0x238] sm:$0xff]
        %v919 = vld [vmem:[#allocation7 + $0x278] sm:$0xff]
        %v920 = vld [vmem:[#allocation7 + $0x2b8] sm:$0xff]
        %v921 = vld [vmem:[#allocation7 + $0x2f8] sm:$0xff]
        %v922 = vld [vmem:[#allocation7 + $0x338] sm:$0xff]
        %v923 = vld [vmem:[#allocation7 + $0x378] sm:$0xff]
        %v924 = vld [vmem:[#allocation7 + $0x3b8] sm:$0xff]
        %v925 = vld [vmem:[#allocation7 + $0x3f8] sm:$0xff]
        %v926 = vld [vmem:[%s3 + $0x2] sm:$0x1]
        %v927 = vld [vmem:[%s3 + $0x3] sm:$0x1]
        %928 = vmatprep.subr.mxu0 0.0
        %929 = vmatpush1.xpose.msra.mxu0 %v906
        %930 = vmatprep.subr.mxu0 0.0
        %931 = vmatpush1.xpose.msra.mxu0 0.0
        %932 = vmatprep.subr.mxu0 0.0
        %933 = vmatpush1.xpose.msra.mxu0 0.0
        %934 = vmatprep.subr.mxu0 0.0
        %935 = vmatpush1.xpose.msra.mxu0 0.0
        %936 = vmatprep.subr.mxu0 0.0
        %937 = vmatpush1.xpose.msra.mxu0 0.0
        %938 = vmatprep.subr.mxu0 0.0
        %939 = vmatpush1.xpose.msra.mxu0 0.0
        %940 = vmatprep.subr.mxu0 0.0
        %941 = vmatpush1.xpose.msra.mxu0 0.0
        %942 = vmatprep.subr.mxu0 0.0
        %943 = vmatpush1.xpose.msra.mxu0 0.0
        %944 = vmatprep.subr.mxu0 0.0
        %945 = vmatpush1.xpose.msra.mxu0 0.0
        %946 = vmatprep.subr.mxu0 0.0
        %947 = vmatpush1.xpose.msra.mxu0 0.0
        %948 = vmatprep.subr.mxu0 0.0
        %949 = vmatpush1.xpose.msra.mxu0 0.0
        %950 = vmatprep.subr.mxu0 0.0
        %951 = vmatpush1.xpose.msra.mxu0 0.0
        %952 = vmatprep.subr.mxu0 0.0
        %953 = vmatpush1.xpose.msra.mxu0 0.0
        %954 = vmatprep.subr.mxu0 0.0
        %955 = vmatpush1.xpose.msra.mxu0 0.0
        %956 = vmatprep.subr.mxu0 0.0
        %957 = vmatpush1.xpose.msra.mxu0 0.0
        %958 = vmatprep.subr.mxu0 0.0
        %959 = vmatpush1.xpose.msra.mxu0 0.0
        %960 = vmatprep.subr.mxu0 0.0
        %961 = vmatpush1.xpose.msra.mxu0 0.0
        %962 = vmatprep.subr.mxu0 0.0
        %963 = vmatpush1.xpose.msra.mxu0 0.0
        %964 = vmatprep.subr.mxu0 0.0
        %965 = vmatpush1.xpose.msra.mxu0 0.0
        %966 = vmatprep.subr.mxu0 0.0
        %967 = vmatpush1.xpose.msra.mxu0 0.0
        %968 = vmatprep.subr.mxu0 0.0
        %969 = vmatpush1.xpose.msra.mxu0 0.0
        %970 = vmatprep.subr.mxu0 0.0
        %971 = vmatpush1.xpose.msra.mxu0 0.0
        %972 = vmatprep.subr.mxu0 0.0
        %973 = vmatpush1.xpose.msra.mxu0 0.0
        %974 = vmatprep.subr.mxu0 0.0
        %975 = vmatpush1.xpose.msra.mxu0 0.0
        %976 = vmatprep.subr.mxu0 0.0
        %977 = vmatpush1.xpose.msra.mxu0 0.0
        %978 = vmatprep.subr.mxu0 0.0
        %979 = vmatpush1.xpose.msra.mxu0 0.0
        %980 = vmatprep.subr.mxu0 0.0
        %981 = vmatpush1.xpose.msra.mxu0 0.0
        %982 = vmatprep.subr.mxu0 0.0
        %983 = vmatpush1.xpose.msra.mxu0 0.0
        %984 = vmatprep.subr.mxu0 0.0
        %985 = vmatpush1.xpose.msra.mxu0 0.0
        %986 = vmatprep.subr.mxu0 0.0
        %987 = vmatpush1.xpose.msra.mxu0 0.0
        %988 = vmatprep.subr.mxu0 0.0
        %989 = vmatpush1.xpose.msra.mxu0 0.0
        %990 = vmatprep.subr.mxu0 0.0
        %991 = vmatpush1.xpose.msra.mxu0 0.0
        %992 = vmatprep.mubr.f32.mxu0 0.0
        %993 = vmatmul.mubr.f32.gmra.mrb[0].mxu0 %v804
        %v994 = vpop.f32.mrb[0].mxu0
        %v995 = vadd.f32 0.0, %v994
        %v996 = vpop.f32.mrb[0].mxu0
        %997 = vdwg.mxu0
        %v998 = vsel %vm543, %v995, -inf
        %999 = vmax.xlane.f32.xlu0 %v998
        %v1000 = vpop.xlane.xlu0 %999
        %v1001 = vsub.f32 %v995, %v1000
        %v1002 = vmul.f32 %v1001, 1.442695
        %v1003 = vpow.pop %v1002
        %v1004 = vsel %vm543, %v1003, 0.0
        %1005 = vadd.xlane.f32.xlu0 %v1004
        %v1006 = vpop.xlane.xlu0 %1005
        %v1007 = vrcp.pop %v1006
        %v1008 = vmul.f32 %v1003, %v1007
        %v1010 = vsel %vm543, %v1008, 0
        %1012 = vmatprep.subr.mxu0 0.0
        %1013 = vmatpush1.msra.mxu0 %v908
        %1014 = vmatprep.subr.mxu0 0.0
        %1015 = vmatpush1.msra.mxu0 0.0
        %1016 = vmatprep.subr.mxu0 0.0
        %1017 = vmatpush1.msra.mxu0 0.0
        %1018 = vmatprep.subr.mxu0 0.0
        %1019 = vmatpush1.msra.mxu0 0.0
        %1020 = vmatprep.subr.mxu0 0.0
        %1021 = vmatpush1.msra.mxu0 0.0
        %1022 = vmatprep.subr.mxu0 0.0
        %1023 = vmatpush1.msra.mxu0 0.0
        %1024 = vmatprep.subr.mxu0 0.0
        %1025 = vmatpush1.msra.mxu0 0.0
        %1026 = vmatprep.subr.mxu0 0.0
        %1027 = vmatpush1.msra.mxu0 0.0
        %1028 = vmatprep.subr.mxu0 0.0
        %1029 = vmatpush1.msra.mxu0 0.0
        %1030 = vmatprep.subr.mxu0 0.0
        %1031 = vmatpush1.msra.mxu0 0.0
        %1032 = vmatprep.subr.mxu0 0.0
        %1033 = vmatpush1.msra.mxu0 0.0
        %1034 = vmatprep.subr.mxu0 0.0
        %1035 = vmatpush1.msra.mxu0 0.0
        %1036 = vmatprep.subr.mxu0 0.0
        %1037 = vmatpush1.msra.mxu0 0.0
        %1038 = vmatprep.subr.mxu0 0.0
        %1039 = vmatpush1.msra.mxu0 0.0
        %1040 = vmatprep.subr.mxu0 0.0
        %1041 = vmatpush1.msra.mxu0 0.0
        %1042 = vmatprep.subr.mxu0 0.0
        %1043 = vmatpush1.msra.mxu0 0.0
        %1044 = vmatprep.subr.mxu0 0.0
        %1045 = vmatpush1.msra.mxu0 0.0
        %1046 = vmatprep.subr.mxu0 0.0
        %1047 = vmatpush1.msra.mxu0 0.0
        %1048 = vmatprep.subr.mxu0 0.0
        %1049 = vmatpush1.msra.mxu0 0.0
        %1050 = vmatprep.subr.mxu0 0.0
        %1051 = vmatpush1.msra.mxu0 0.0
        %1052 = vmatprep.subr.mxu0 0.0
        %1053 = vmatpush1.msra.mxu0 0.0
        %1054 = vmatprep.subr.mxu0 0.0
        %1055 = vmatpush1.msra.mxu0 0.0
        %1056 = vmatprep.subr.mxu0 0.0
        %1057 = vmatpush1.msra.mxu0 0.0
        %1058 = vmatprep.subr.mxu0 0.0
        %1059 = vmatpush1.msra.mxu0 0.0
        %1060 = vmatprep.subr.mxu0 0.0
        %1061 = vmatpush1.msra.mxu0 0.0
        %1062 = vmatprep.subr.mxu0 0.0
        %1063 = vmatpush1.msra.mxu0 0.0
        %1064 = vmatprep.subr.mxu0 0.0
        %1065 = vmatpush1.msra.mxu0 0.0
        %1066 = vmatprep.subr.mxu0 0.0
        %1067 = vmatpush1.msra.mxu0 0.0
        %1068 = vmatprep.subr.mxu0 0.0
        %1069 = vmatpush1.msra.mxu0 0.0
        %1070 = vmatprep.subr.mxu0 0.0
        %1071 = vmatpush1.msra.mxu0 0.0
        %1072 = vmatprep.subr.mxu0 0.0
        %1073 = vmatpush1.msra.mxu0 0.0
        %1074 = vmatprep.subr.mxu0 0.0
        %1075 = vmatpush1.msra.mxu0 0.0
        %1076 = vmatprep.mubr.f32.mxu0 0.0
        %1077 = vmatmul.mubr.f32.gmra.mrb[0].mxu0 %v1010
        %v1078 = vpop.f32.mrb[0].mxu0
        %v1079 = vadd.f32 0.0, %v1078
        %v1080 = vpop.f32.mrb[0].mxu0
        %1081 = vdwg.mxu0
        %1082 = vmatprep.subr.mxu0 0.0
        %1083 = vmatpush1.msra.mxu0 %v910
        %1084 = vmatprep.subr.mxu0 0.0
        %1085 = vmatpush1.msra.mxu0 %v911
        %1086 = vmatprep.subr.mxu0 0.0
        %1087 = vmatpush1.msra.mxu0 %v912
        %1088 = vmatprep.subr.mxu0 0.0
        %1089 = vmatpush1.msra.mxu0 %v913
        %1090 = vmatprep.subr.mxu0 0.0
        %1091 = vmatpush1.msra.mxu0 %v914
        %1092 = vmatprep.subr.mxu0 0.0
        %1093 = vmatpush1.msra.mxu0 %v915
        %1094 = vmatprep.subr.mxu0 0.0
        %1095 = vmatpush1.msra.mxu0 %v916
        %1096 = vmatprep.subr.mxu0 0.0
        %1097 = vmatpush1.msra.mxu0 %v917
        %1098 = vmatprep.subr.mxu0 0.0
        %1099 = vmatpush1.msra.mxu0 %v918
        %1100 = vmatprep.subr.mxu0 0.0
        %1101 = vmatpush1.msra.mxu0 %v919
        %1102 = vmatprep.subr.mxu0 0.0
        %1103 = vmatpush1.msra.mxu0 %v920
        %1104 = vmatprep.subr.mxu0 0.0
        %1105 = vmatpush1.msra.mxu0 %v921
        %1106 = vmatprep.subr.mxu0 0.0
        %1107 = vmatpush1.msra.mxu0 %v922
        %1108 = vmatprep.subr.mxu0 0.0
        %1109 = vmatpush1.msra.mxu0 %v923
        %1110 = vmatprep.subr.mxu0 0.0
        %1111 = vmatpush1.msra.mxu0 %v924
        %1112 = vmatprep.subr.mxu0 0.0
        %1113 = vmatpush1.msra.mxu0 %v925
        %1114 = vmatprep.subr.mxu0 0.0
        %1115 = vmatpush1.msra.mxu0 0.0
        %1116 = vmatprep.subr.mxu0 0.0
        %1117 = vmatpush1.msra.mxu0 0.0
        %1118 = vmatprep.subr.mxu0 0.0
        %1119 = vmatpush1.msra.mxu0 0.0
        %1120 = vmatprep.subr.mxu0 0.0
        %1121 = vmatpush1.msra.mxu0 0.0
        %1122 = vmatprep.subr.mxu0 0.0
        %1123 = vmatpush1.msra.mxu0 0.0
        %1124 = vmatprep.subr.mxu0 0.0
        %1125 = vmatpush1.msra.mxu0 0.0
        %1126 = vmatprep.subr.mxu0 0.0
        %1127 = vmatpush1.msra.mxu0 0.0
        %1128 = vmatprep.subr.mxu0 0.0
        %1129 = vmatpush1.msra.mxu0 0.0
        %1130 = vmatprep.subr.mxu0 0.0
        %1131 = vmatpush1.msra.mxu0 0.0
        %1132 = vmatprep.subr.mxu0 0.0
        %1133 = vmatpush1.msra.mxu0 0.0
        %1134 = vmatprep.subr.mxu0 0.0
        %1135 = vmatpush1.msra.mxu0 0.0
        %1136 = vmatprep.subr.mxu0 0.0
        %1137 = vmatpush1.msra.mxu0 0.0
        %1138 = vmatprep.subr.mxu0 0.0
        %1139 = vmatpush1.msra.mxu0 0.0
        %1140 = vmatprep.subr.mxu0 0.0
        %1141 = vmatpush1.msra.mxu0 0.0
        %1142 = vmatprep.subr.mxu0 0.0
        %1143 = vmatpush1.msra.mxu0 0.0
        %1144 = vmatprep.subr.mxu0 0.0
        %1145 = vmatpush1.msra.mxu0 0.0
        %1146 = vmatprep.mubr.f32.mxu0 0.0
        %1147 = vmatmul.mubr.f32.gmra.mrb[0].mxu0 %v1079
        %v1148 = vpop.f32.mrb[0].mxu0
        %v1149 = vadd.f32 %v720, %v1148
        %v1150 = vpop.f32.mrb[0].mxu0
        %1151 = vdwg.mxu0
        %1152 = vadd.xlane.f32.xlu0 %v1149
        %v1153 = vpop.xlane.xlu0 %1152
        %v1154 = vmul.f32 %v1149, %v1149
        %1155 = vadd.xlane.f32.xlu0 %v1154
        %v1156 = vpop.xlane.xlu0 %1155
        %v1157 = vmul.f32 %v1153, 0.03125
        %v1158 = vmul.f32 %v1156, 0.03125
        %v1159 = vmul.f32 %v1157, %v1157
        %v1160 = vsub.f32 %v1158, %v1159
        %v1161 = vsub.f32 %v1149, %v1157
        %v1162 = vadd.f32 %v1160, 1e-05
        %v1163 = vrsqrt.pop %v1162
        %v1164 = vmul.f32 %v1161, %v1163
        %v1165 = vlaneseq
        %v1166 = vshrl.u32 %v1165, 7
        %v1167 = vsub.s32 0, %v1166
        %v1168 = vrot.slane %v926, %v1167
        %v1169 = vmul.f32 %v1164, %v1168
        %v1170 = vlaneseq
        %v1171 = vshrl.u32 %v1170, 7
        %v1172 = vsub.s32 0, %v1171
        %v1173 = vrot.slane %v927, %v1172
        %v1174 = vadd.f32 %v1169, %v1173
        %v1175 = vld [vmem:[%s3 + $0x6] sm:$0x1]
        %v1176 = vld [vmem:[%s3 + $0x7] sm:$0x1]
        %v1177 = vlaneseq
        %v1178 = vshrl.u32 %v1177, 7
        %v1179 = vsub.s32 0, %v1178
        %v1180 = vrot.slane %v1175, %v1179
        %v1181 = vmul.f32 %v1174, %v1180
        %1182 = vadd.xlane.f32.xlu0 %v1181
        %v1183 = vpop.xlane.xlu0 %1182
        %v1184 = vmax.f32 %v1183, 0.0
        %v1185 = vlaneseq
        %v1186 = vshrl.u32 %v1185, 7
        %v1187 = vsub.s32 0, %v1186
        %v1188 = vrot.slane %v1176, %v1187
        %v1189 = vmul.f32 %v1184, %v1188
        %v1190 = vadd.f32 %v1189, %v1174
        %v1191 = vld [vmem:[%s3 + $0x4] sm:$0x1]
        %v1192 = vld [vmem:[%s3 + $0x5] sm:$0x1]
        %1193 = vadd.xlane.f32.xlu0 %v1190
        %v1194 = vpop.xlane.xlu0 %1193
        %v1195 = vmul.f32 %v1190, %v1190
        %1196 = vadd.xlane.f32.xlu0 %v1195
        %v1197 = vpop.xlane.xlu0 %1196
        %v1198 = vmul.f32 %v1194, 0.03125
        %v1199 = vmul.f32 %v1197, 0.03125
        %v1200 = vmul.f32 %v1198, %v1198
        %v1201 = vsub.f32 %v1199, %v1200
        %v1202 = vsub.f32 %v1190, %v1198
        %v1203 = vadd.f32 %v1201, 1e-05
        %v1204 = vrsqrt.pop %v1203
        %v1205 = vmul.f32 %v1202, %v1204
        %v1206 = vlaneseq
        %v1207 = vshrl.u32 %v1206, 7
        %v1208 = vsub.s32 0, %v1207
        %v1209 = vrot.slane %v1191, %v1208
        %v1210 = vmul.f32 %v1205, %v1209
        %v1211 = vlaneseq
        %v1212 = vshrl.u32 %v1211, 7
        %v1213 = vsub.s32 0, %v1212
        %v1214 = vrot.slane %v1192, %v1213
        %v1215 = vadd.f32 %v1210, %v1214
        %1216 = vst [vmem:[%s263] sm:$0xff] %v1215
        %s1217 = sand.u32 %s126, 1
        %s1218 = scalar_lea.sflag [#allocation4], %s1217
        %s1219 = sand.u32 %s126, 1
        %s1220 = smul.addr %s1219, 8
        %s1221 = scalar_lea.vmem [#allocation8], %s1220
        // Predicated region
        $region49: #{tpu_custom_call.1} parent=35 // pred_check
          %p1222 = pneg %p136
        $region50: #{tpu_custom_call.1} parent=35 // pred_check_branch
          %1224 = sbr.rel (%p1222) target = $region52
        $region51: #{tpu_custom_call.1} parent=35 // pred_region
          %s1226 = ssub.s32 128, 128
          %1227 = vsyncadd %s1218, %s1226
          %s1228 = smul.addr %s24, 128
          %s1229 = scalar_lea.hbm %s4, %s1228
          %s1231 = sshll.u32 %s1221, 4
          %s1232 = int_to_ptr.vmem [resolvable:$true] %s1231
          %1234 = dma.vmem_to_hbm [thread:$0]  %s1232, 128, %s1229, %s1218
        $region52: #{tpu_custom_call.1} parent=35 // pred_fallthru
          _
      $region36: #{tpu_custom_call.1} parent=5 // pred_fallthru
        _
      %p1235 = scmp.le.s32.totalorder 2, %s19
      // Predicated region
      $region53: #{tpu_custom_call.1} parent=5 // pred_check
        %p1236 = pneg %p1235
      $region54: #{tpu_custom_call.1} parent=5 // pred_check_branch
        %1238 = sbr.rel (%p1236) target = $region56
      $region55: #{tpu_custom_call.1} parent=5 // pred_region
        %s1239 = ssub.s32 %s19, 2
        // Predicated region
        $region57: #{tpu_custom_call.1} parent=55 // pred_check
          %p1240 = pneg %p142
        $region58: #{tpu_custom_call.1} parent=55 // pred_check_branch
          %1242 = sbr.rel (%p1240) target = $region60
        $region59: #{tpu_custom_call.1} parent=55 // pred_region
          %s1243 = sand.u32 %s127, 1
          %s1244 = scalar_lea.sflag [#allocation4], %s1243
          %s1245 = sand.u32 %s127, 1
          %s1246 = smul.addr %s1245, 8
          %s1247 = scalar_lea.vmem [#allocation8], %s1246
          %1248 = dma.done %s1244, 128
        $region60: #{tpu_custom_call.1} parent=55 // pred_fallthru
          _
      $region56: #{tpu_custom_call.1} parent=5 // pred_fallthru
        _
    $region6: #{tpu_custom_call.1} parent=1 // loop_footer
      %s23 = sadd.s32 1, %s19
    $region7: #{tpu_custom_call.1} parent=1 // loop_footer_branch
      %18 = sbr.rel target = $region3
    $region8: #{tpu_custom_call.1} parent=1 // loop_exit
      _
    %1249 = vsyncpa [#allocation3], 1
    %s1250 = scalar_lea.sflag [#allocation3], 1
    %1251 = vsyncpa %s1250, 1
    %1252 = vsyncpa [#allocation6], 1
    %s1253 = scalar_lea.sflag [#allocation6], 1
    %1254 = vsyncpa %s1253, 1
    %1255 = vsyncpa [#allocation4], 1
    %s1256 = scalar_lea.sflag [#allocation4], 1
    %1257 = vsyncpa %s1256, 1

</llo_original>
